<compile_context>
chip_gen: v5e
topology: v5e:2x2
jax: 0.10.0
libtpu: 0.0.40
codegen_flags: <defaults>
</compile_context>

<pallas_src>
import functools
import math

import jax
import jax.numpy as jnp
from jax.experimental import pallas as pl
from jax.experimental.pallas import tpu as pltpu


# ----------------------------- in-kernel helpers -----------------------------

def _layernorm(x, gamma, beta, eps=1e-5):
    mean = jnp.mean(x, axis=-1, keepdims=True)
    var = jnp.mean(jnp.square(x - mean), axis=-1, keepdims=True)
    return (x - mean) * jax.lax.rsqrt(var + eps) * gamma + beta


# ------------------------------- Pallas kernel --------------------------------

def layer_kernel(x_ref, small_ref, wq_ref, wk_ref, wv_ref, wout_ref,
                 w1_ref, b1_ref, w2_ref,
                 o_ref, acc_ref, *, batch, seq, heads, dim_head, scale):
    """One full transformer layer on the resident (B*N, D) activation.

    grid = (depth,). acc_ref (VMEM scratch, f32) carries the residual stream across
    layers; o_ref (same HBM block for every step) is written only on the last layer.
    """
    d = pl.program_id(0)
    last = pl.num_programs(0) - 1
    inner = heads * dim_head

    # First layer: load the input activation into the f32 residual accumulator.
    @pl.when(d == 0)
    def _():
        acc_ref[...] = x_ref[...].astype(jnp.float32)

    x = acc_ref[...]                                        # (B*N, D) f32 residual path

    # Packed small params: rows = [ln1_g, ln1_b, b_out, ln2_g, ln2_b, b2]
    small = small_ref[...]                                   # (6, D) f32
    ln1g, ln1b = small[0:1, :], small[1:2, :]
    bout = small[2:3, :]
    ln2g, ln2b = small[3:4, :], small[4:5, :]
    b2 = small[5:6, :]

    # ------------------- PreNorm -> Attention -> + residual -------------------
    xn = _layernorm(x, ln1g, ln1b).astype(jnp.bfloat16)      # (B*N, D) bf16

    # Fused (all-heads) projections: lane-dense, contraction over D, f32 accumulate.
    q = jnp.dot(xn, wq_ref[...], preferred_element_type=jnp.float32) * scale
    k = jnp.dot(xn, wk_ref[...], preferred_element_type=jnp.float32)
    v = jnp.dot(xn, wv_ref[...], preferred_element_type=jnp.float32)

    # Leading-dim split only (seq is a multiple of 8, layout-preserving for f32).
    q3 = q.reshape(batch, seq, inner)
    k3 = k.reshape(batch, seq, inner)
    v3 = v.reshape(batch, seq, inner)

    # Per-head attention core (static unrolled loop; batched over B on the MXU).
    # TODO(synk): flash-style KV tiling here for long sequences.
    head_outs = []
    for h in range(heads):
        sl = slice(h * dim_head, (h + 1) * dim_head)
        qh = q3[:, :, sl].astype(jnp.bfloat16)               # (B, N, dh)
        kh = k3[:, :, sl].astype(jnp.bfloat16)
        vh = v3[:, :, sl].astype(jnp.bfloat16)
        dots = jnp.einsum('bnk,bmk->bnm', qh, kh,
                          preferred_element_type=jnp.float32)  # (B, N, N) f32
        dots = dots - jnp.max(dots, axis=-1, keepdims=True)
        e = jnp.exp(dots)
        inv_den = pl.reciprocal(jnp.sum(e, axis=-1, keepdims=True), approx=True)
        p = (e * inv_den).astype(jnp.bfloat16)
        head_outs.append(jnp.einsum('bnm,bmk->bnk', p, vh,
                                    preferred_element_type=jnp.float32))  # (B, N, dh)

    ctx = jnp.concatenate(head_outs, axis=-1)                # (B, N, inner) f32
    ctx = ctx.reshape(batch * seq, inner).astype(jnp.bfloat16)

    # Fused output projection (head-sum folded into a single inner-wide contraction).
    y = jnp.dot(ctx, wout_ref[...], preferred_element_type=jnp.float32) + bout
    x = x + y

    # ------------------ PreNorm -> FeedForward -> + residual ------------------
    xn2 = _layernorm(x, ln2g, ln2b).astype(jnp.bfloat16)
    h1 = jnp.dot(xn2, w1_ref[...], preferred_element_type=jnp.float32) + b1_ref[...]
    # exact GELU (erf), matching nn.GELU() default; f32 on the EUP
    h1 = 0.5 * h1 * (1.0 + jax.lax.erf(h1 * (1.0 / math.sqrt(2.0))))
    y2 = jnp.dot(h1.astype(jnp.bfloat16), w2_ref[...],
                 preferred_element_type=jnp.float32) + b2
    x = x + y2

    acc_ref[...] = x

    @pl.when(d == last)
    def _():
        o_ref[...] = x.astype(o_ref.dtype)


# --------------------------------- wrapper ------------------------------------

def _pick_vmem_limit():
    cap = None
    try:
        cap = pltpu.get_tpu_info().vmem_capacity_bytes
    except Exception:
        cap = None
    if not cap:
        cap = 64 * 1024 * 1024
    # leave ~10% headroom; never ask for more than 112 MiB even on 128 MiB parts
    return int(min(cap * 0.9, 112 * 1024 * 1024))


def transformer_forward(x, params, *, heads, dim_head):
    """Applies all `depth` layers in one pallas_call. params holds depth-stacked arrays."""
    B, N, D = x.shape
    depth = params['wq'].shape[0]
    inner = heads * dim_head
    mlp_dim = params['w1'].shape[-1]
    scale = dim_head ** (-0.5)
    BN = B * N
    assert N % 8 == 0, "sequence length must be a multiple of 8 (f32 sublane tile)"

    x2 = x.reshape(BN, D)

    # Pack the six (depth, 1, D) small params into one (depth, 6, D) input.
    small = jnp.concatenate([params['ln1_g'], params['ln1_b'], params['b_out'],
                             params['ln2_g'], params['ln2_b'], params['b2']], axis=1)

    def wspec(tail_shape):
        # depth-stacked weight: one layer's block per depth step (leading dim squeezed).
        nd = len(tail_shape)
        return pl.BlockSpec((None,) + tail_shape,
                            lambda d, _n=nd: (d,) + (0,) * _n)

    in_specs = [
        pl.BlockSpec((BN, D), lambda d: (0, 0)),   # x  (constant block -> fetched once)
        wspec((6, D)),                             # packed ln/bias params
        wspec((D, inner)),                         # wq
        wspec((D, inner)),                         # wk
        wspec((D, inner)),                         # wv
        wspec((inner, D)),                         # w_out
        wspec((D, mlp_dim)),                       # w1
        wspec((1, mlp_dim)),                       # b1
        wspec((mlp_dim, D)),                       # w2
    ]
    out_spec = pl.BlockSpec((BN, D), lambda d: (0, 0))

    kernel = functools.partial(layer_kernel, batch=B, seq=N, heads=heads,
                               dim_head=dim_head, scale=scale)

    fn = pl.pallas_call(
        kernel,
        grid=(depth,),
        in_specs=in_specs,
        out_specs=out_spec,
        out_shape=jax.ShapeDtypeStruct((BN, D), x.dtype),
        scratch_shapes=[pltpu.VMEM((BN, D), jnp.float32)],   # f32 residual accumulator
        compiler_params=pltpu.CompilerParams(
            dimension_semantics=("arbitrary",),              # depth carries the residual
            vmem_limit_bytes=_pick_vmem_limit(),
        ),
    )
    out = fn(x2, small, params['wq'], params['wk'], params['wv'], params['w_out'],
             params['w1'], params['b1'], params['w2'])
    return out.reshape(B, N, D)


# ------------------------------ param init ------------------------------------

def init_params(key, *, dim, depth, heads, dim_head, mlp_dim):
    inner = heads * dim_head
    ks = jax.random.split(key, 7)

    def rnd_bf16(k, shape, fan_in):
        # matmul weights are stored in bf16 once, outside the per-call path
        return (jax.random.normal(k, shape, jnp.float32) / math.sqrt(fan_in)
                ).astype(jnp.bfloat16)

    params = {
        # LayerNorm affine params / biases stay f32 (feed f32 stats & accumulators)
        'ln1_g': jnp.ones((depth, 1, dim), jnp.float32),
        'ln1_b': jnp.zeros((depth, 1, dim), jnp.float32),
        'ln2_g': jnp.ones((depth, 1, dim), jnp.float32),
        'ln2_b': jnp.zeros((depth, 1, dim), jnp.float32),
        # attention weights, flat all-heads layout (depth, D, inner) / (depth, inner, D)
        'wq': rnd_bf16(ks[0], (depth, dim, inner), dim),
        'wk': rnd_bf16(ks[1], (depth, dim, inner), dim),
        'wv': rnd_bf16(ks[2], (depth, dim, inner), dim),
        'w_out': rnd_bf16(ks[3], (depth, inner, dim), inner),
        'b_out': jnp.zeros((depth, 1, dim), jnp.float32),
        # feedforward weights
        'w1': rnd_bf16(ks[4], (depth, dim, mlp_dim), dim),
        'b1': 0.01 * jax.random.normal(ks[5], (depth, 1, mlp_dim), jnp.float32),
        'w2': rnd_bf16(ks[6], (depth, mlp_dim, dim), mlp_dim),
        'b2': jnp.zeros((depth, 1, dim), jnp.float32),
    }
    return params


# --------------------------- pure-JAX reference --------------------------------

def reference_forward(x, params, *, heads, dim_head):
    scale = dim_head ** (-0.5)
    hi = jax.lax.Precision.HIGHEST
    f32 = jnp.float32
    depth = params['wq'].shape[0]
    for i in range(depth):
        xn = _layernorm(x, params['ln1_g'][i], params['ln1_b'][i])
        q = jnp.einsum('bnd,dk->bnk', xn, params['wq'][i].astype(f32), precision=hi)
        k = jnp.einsum('bnd,dk->bnk', xn, params['wk'][i].astype(f32), precision=hi)
        v = jnp.einsum('bnd,dk->bnk', xn, params['wv'][i].astype(f32), precision=hi)
        B, N, _ = q.shape

        def split(t):
            return t.reshape(B, N, heads, dim_head).transpose(0, 2, 1, 3)

        qh, kh, vh = split(q), split(k), split(v)
        dots = jnp.einsum('bhnk,bhmk->bhnm', qh, kh, precision=hi) * scale
        attn = jax.nn.softmax(dots, axis=-1)
        out = jnp.einsum('bhnm,bhmk->bhnk', attn, vh, precision=hi)
        out = out.transpose(0, 2, 1, 3).reshape(B, N, heads * dim_head)
        y = jnp.einsum('bnk,kd->bnd', out, params['w_out'][i].astype(f32), precision=hi)
        x = x + y + params['b_out'][i]

        xn2 = _layernorm(x, params['ln2_g'][i], params['ln2_b'][i])
        h = jnp.einsum('bnd,dm->bnm', xn2, params['w1'][i].astype(f32),
                       precision=hi) + params['b1'][i]
        h = 0.5 * h * (1.0 + jax.lax.erf(h / math.sqrt(2.0)))
        x = jnp.einsum('bnm,md->bnd', h, params['w2'][i].astype(f32),
                       precision=hi) + params['b2'][i] + x
    return x


# ----------------------------------- main --------------------------------------

if __name__ == "__main__":
    dim, depth, heads, dim_head, mlp_dim = 32, 2, 2, 16, 64
    B, N = 2, 8

    key = jax.random.PRNGKey(0)
    kx, kp = jax.random.split(key)
    x = jax.random.normal(kx, (B, N, dim), jnp.float32)
    params = init_params(kp, dim=dim, depth=depth, heads=heads,
                         dim_head=dim_head, mlp_dim=mlp_dim)

    out = transformer_forward(x, params, heads=heads, dim_head=dim_head)
    out = jax.block_until_ready(out)

    ref = reference_forward(x, params, heads=heads, dim_head=dim_head)
    assert out.shape == (B, N, dim)
    max_err = float(jnp.max(jnp.abs(out - ref)))
    ref_scale = max(1.0, float(jnp.max(jnp.abs(ref))))
    # kernel feeds the MXU bf16 operands (f32 accumulation) -> relative tolerance
    assert max_err <= 5e-2 * ref_scale, f"mismatch vs reference: {max_err} (scale {ref_scale})"

    print("KERNEL_OK")
</pallas_src>

<mosaic_0001>
module attributes {stable_mosaic.version = 11 : i64} {
  func.func @layer_kernel(%arg0: i32, %arg1: memref<16x32xf32, #tpu.memory_space<vmem>>, %arg2: memref<1x6x32xf32, #tpu.memory_space<vmem>>, %arg3: memref<1x32x32xbf16, #tpu.memory_space<vmem>>, %arg4: memref<1x32x32xbf16, #tpu.memory_space<vmem>>, %arg5: memref<1x32x32xbf16, #tpu.memory_space<vmem>>, %arg6: memref<1x32x32xbf16, #tpu.memory_space<vmem>>, %arg7: memref<1x32x64xbf16, #tpu.memory_space<vmem>>, %arg8: memref<1x1x64xf32, #tpu.memory_space<vmem>>, %arg9: memref<1x64x32xbf16, #tpu.memory_space<vmem>>, %arg10: memref<16x32xf32, #tpu.memory_space<vmem>>, %arg11: memref<16x32xf32, #tpu.memory_space<vmem>>) attributes {dimension_semantics = [#tpu.dimension_semantics<arbitrary>], iteration_bounds = array<i64: 2>, scalar_prefetch = 0 : i64, scratch_operands = 1 : i64, tpu.core_type = #tpu.core_type<tc>, window_params = [{pipeline_mode = #tpu.pipeline_mode<synchronous>, transform_indices = @transform_0, window_bounds = array<i64: 16, 32>}, {transform_indices = @transform_1, window_bounds = array<i64: 1, 6, 32>}, {transform_indices = @transform_2, window_bounds = array<i64: 1, 32, 32>}, {transform_indices = @transform_3, window_bounds = array<i64: 1, 32, 32>}, {transform_indices = @transform_4, window_bounds = array<i64: 1, 32, 32>}, {transform_indices = @transform_5, window_bounds = array<i64: 1, 32, 32>}, {transform_indices = @transform_6, window_bounds = array<i64: 1, 32, 64>}, {transform_indices = @transform_7, window_bounds = array<i64: 1, 1, 64>}, {transform_indices = @transform_8, window_bounds = array<i64: 1, 64, 32>}, {pipeline_mode = #tpu.pipeline_mode<synchronous>, transform_indices = @transform_9, window_bounds = array<i64: 16, 32>}]} {
    %c0_i32 = arith.constant 0 : i32
    %0 = arith.cmpi eq, %arg0, %c0_i32 : i32
    %1 = arith.extui %0 : i1 to i32
    %c0_i32_0 = arith.constant 0 : i32
    %2 = arith.cmpi ne, %1, %c0_i32_0 : i32
    scf.if %2 {
      %c0_56 = arith.constant 0 : index
      %c0_57 = arith.constant 0 : index
      %145 = vector.load %arg1[%c0_56, %c0_57] : memref<16x32xf32, #tpu.memory_space<vmem>>, vector<16x32xf32>
      %c0_58 = arith.constant 0 : index
      %c0_59 = arith.constant 0 : index
      %146 = vector.load %arg11[%c0_58, %c0_59] : memref<16x32xf32, #tpu.memory_space<vmem>>, vector<16x32xf32>
      tpu.vector_store %arg11[%c0_58, %c0_59], %145 {strides = array<i32>} : memref<16x32xf32, #tpu.memory_space<vmem>>, vector<16x32xf32>,
    } else {
    }
    %c0 = arith.constant 0 : index
    %c0_1 = arith.constant 0 : index
    %3 = vector.load %arg11[%c0, %c0_1] : memref<16x32xf32, #tpu.memory_space<vmem>>, vector<16x32xf32>
    %c0_2 = arith.constant 0 : index
    %c0_3 = arith.constant 0 : index
    %c0_4 = arith.constant 0 : index
    %4 = vector.load %arg2[%c0_2, %c0_3, %c0_4] : memref<1x6x32xf32, #tpu.memory_space<vmem>>, vector<1x6x32xf32>
    %5 = vector.shape_cast %4 : vector<1x6x32xf32> to vector<6x32xf32>
    %6 = vector.extract_strided_slice %5 {offsets = [0, 0], sizes = [1, 32], strides = [1, 1]} : vector<6x32xf32> to vector<1x32xf32>
    %7 = vector.extract_strided_slice %5 {offsets = [1, 0], sizes = [1, 32], strides = [1, 1]} : vector<6x32xf32> to vector<1x32xf32>
    %8 = vector.extract_strided_slice %5 {offsets = [2, 0], sizes = [1, 32], strides = [1, 1]} : vector<6x32xf32> to vector<1x32xf32>
    %9 = vector.extract_strided_slice %5 {offsets = [3, 0], sizes = [1, 32], strides = [1, 1]} : vector<6x32xf32> to vector<1x32xf32>
    %10 = vector.extract_strided_slice %5 {offsets = [4, 0], sizes = [1, 32], strides = [1, 1]} : vector<6x32xf32> to vector<1x32xf32>
    %11 = vector.extract_strided_slice %5 {offsets = [5, 0], sizes = [1, 32], strides = [1, 1]} : vector<6x32xf32> to vector<1x32xf32>
    %cst = arith.constant dense<0.000000e+00> : vector<16xf32>
    %12 = vector.multi_reduction <add>, %3, %cst [1] : vector<16x32xf32> to vector<16xf32>
    %13 = vector.shape_cast %12 : vector<16xf32> to vector<16x1xf32>
    %cst_5 = arith.constant 3.200000e+01 : f32
    %14 = vector.broadcast %cst_5 : f32 to vector<16x1xf32>
    %15 = arith.divf %13, %14 : vector<16x1xf32>
    %16 = vector.broadcast %15 : vector<16x1xf32> to vector<16x32xf32>
    %17 = arith.subf %3, %16 : vector<16x32xf32>
    %18 = arith.mulf %17, %17 : vector<16x32xf32>
    %cst_6 = arith.constant dense<0.000000e+00> : vector<16xf32>
    %19 = vector.multi_reduction <add>, %18, %cst_6 [1] : vector<16x32xf32> to vector<16xf32>
    %20 = vector.shape_cast %19 : vector<16xf32> to vector<16x1xf32>
    %cst_7 = arith.constant 3.200000e+01 : f32
    %21 = vector.broadcast %cst_7 : f32 to vector<16x1xf32>
    %22 = arith.divf %20, %21 : vector<16x1xf32>
    %23 = vector.broadcast %15 : vector<16x1xf32> to vector<16x32xf32>
    %24 = arith.subf %3, %23 : vector<16x32xf32>
    %cst_8 = arith.constant 9.99999974E-6 : f32
    %25 = vector.broadcast %cst_8 : f32 to vector<16x1xf32>
    %26 = arith.addf %22, %25 : vector<16x1xf32>
    %27 = math.rsqrt %26 : vector<16x1xf32>
    %28 = vector.broadcast %27 : vector<16x1xf32> to vector<16x32xf32>
    %29 = arith.mulf %24, %28 : vector<16x32xf32>
    %30 = vector.broadcast %6 : vector<1x32xf32> to vector<16x32xf32>
    %31 = arith.mulf %29, %30 : vector<16x32xf32>
    %32 = vector.broadcast %7 : vector<1x32xf32> to vector<16x32xf32>
    %33 = arith.addf %31, %32 : vector<16x32xf32>
    %34 = arith.truncf %33 : vector<16x32xf32> to vector<16x32xbf16>
    %c0_9 = arith.constant 0 : index
    %c0_10 = arith.constant 0 : index
    %c0_11 = arith.constant 0 : index
    %35 = vector.load %arg3[%c0_9, %c0_10, %c0_11] : memref<1x32x32xbf16, #tpu.memory_space<vmem>>, vector<1x32x32xbf16>
    %36 = vector.shape_cast %35 : vector<1x32x32xbf16> to vector<32x32xbf16>
    %cst_12 = arith.constant dense<0.000000e+00> : vector<16x32xf32>
    %37 = tpu.matmul %34, %36, %cst_12 {dimension_numbers = #tpu.dot_dimension_numbers<[1], [0], [0], [1], [0, 0, 1, 1], [], []>} : vector<16x32xbf16>, vector<32x32xbf16>, vector<16x32xf32> -> vector<16x32xf32>
    %cst_13 = arith.constant 2.500000e-01 : f32
    %38 = vector.broadcast %cst_13 : f32 to vector<16x32xf32>
    %39 = arith.mulf %37, %38 : vector<16x32xf32>
    %c0_14 = arith.constant 0 : index
    %c0_15 = arith.constant 0 : index
    %c0_16 = arith.constant 0 : index
    %40 = vector.load %arg4[%c0_14, %c0_15, %c0_16] : memref<1x32x32xbf16, #tpu.memory_space<vmem>>, vector<1x32x32xbf16>
    %41 = vector.shape_cast %40 : vector<1x32x32xbf16> to vector<32x32xbf16>
    %cst_17 = arith.constant dense<0.000000e+00> : vector<16x32xf32>
    %42 = tpu.matmul %34, %41, %cst_17 {dimension_numbers = #tpu.dot_dimension_numbers<[1], [0], [0], [1], [0, 0, 1, 1], [], []>} : vector<16x32xbf16>, vector<32x32xbf16>, vector<16x32xf32> -> vector<16x32xf32>
    %c0_18 = arith.constant 0 : index
    %c0_19 = arith.constant 0 : index
    %c0_20 = arith.constant 0 : index
    %43 = vector.load %arg5[%c0_18, %c0_19, %c0_20] : memref<1x32x32xbf16, #tpu.memory_space<vmem>>, vector<1x32x32xbf16>
    %44 = vector.shape_cast %43 : vector<1x32x32xbf16> to vector<32x32xbf16>
    %cst_21 = arith.constant dense<0.000000e+00> : vector<16x32xf32>
    %45 = tpu.matmul %34, %44, %cst_21 {dimension_numbers = #tpu.dot_dimension_numbers<[1], [0], [0], [1], [0, 0, 1, 1], [], []>} : vector<16x32xbf16>, vector<32x32xbf16>, vector<16x32xf32> -> vector<16x32xf32>
    %46 = vector.shape_cast %39 : vector<16x32xf32> to vector<2x8x32xf32>
    %47 = vector.shape_cast %42 : vector<16x32xf32> to vector<2x8x32xf32>
    %48 = vector.shape_cast %45 : vector<16x32xf32> to vector<2x8x32xf32>
    %49 = vector.extract_strided_slice %46 {offsets = [0, 0, 0], sizes = [2, 8, 16], strides = [1, 1, 1]} : vector<2x8x32xf32> to vector<2x8x16xf32>
    %50 = arith.truncf %49 : vector<2x8x16xf32> to vector<2x8x16xbf16>
    %51 = vector.extract_strided_slice %47 {offsets = [0, 0, 0], sizes = [2, 8, 16], strides = [1, 1, 1]} : vector<2x8x32xf32> to vector<2x8x16xf32>
    %52 = arith.truncf %51 : vector<2x8x16xf32> to vector<2x8x16xbf16>
    %53 = vector.extract_strided_slice %48 {offsets = [0, 0, 0], sizes = [2, 8, 16], strides = [1, 1, 1]} : vector<2x8x32xf32> to vector<2x8x16xf32>
    %54 = arith.truncf %53 : vector<2x8x16xf32> to vector<2x8x16xbf16>
    "tpu.trace_start"() <{level = 10 : i32, message = "bnk,bmk->bnm"}> : () -> ()
    %cst_22 = arith.constant dense<0.000000e+00> : vector<2x8x8xf32>
    %55 = tpu.matmul %50, %52, %cst_22 {dimension_numbers = #tpu.dot_dimension_numbers<[2], [2], [1], [1], [0, 0, 0, 1, 1, 1], [0], [0]>} : vector<2x8x16xbf16>, vector<2x8x16xbf16>, vector<2x8x8xf32> -> vector<2x8x8xf32>
    "tpu.trace_stop"() : () -> ()
    %cst_23 = arith.constant dense<0xFF800000> : vector<2x8xf32>
    %56 = vector.multi_reduction <maximumf>, %55, %cst_23 [2] : vector<2x8x8xf32> to vector<2x8xf32>
    %57 = vector.shape_cast %56 : vector<2x8xf32> to vector<2x8x1xf32>
    %58 = vector.broadcast %57 : vector<2x8x1xf32> to vector<2x8x8xf32>
    %59 = arith.subf %55, %58 : vector<2x8x8xf32>
    %60 = math.exp %59 : vector<2x8x8xf32>
    %cst_24 = arith.constant dense<0.000000e+00> : vector<2x8xf32>
    %61 = vector.multi_reduction <add>, %60, %cst_24 [2] : vector<2x8x8xf32> to vector<2x8xf32>
    %62 = vector.shape_cast %61 : vector<2x8xf32> to vector<2x8x1xf32>
    %63 = tpu.reciprocal %62 {approx = true} : vector<2x8x1xf32> -> vector<2x8x1xf32>
    %64 = vector.broadcast %63 : vector<2x8x1xf32> to vector<2x8x8xf32>
    %65 = arith.mulf %60, %64 : vector<2x8x8xf32>
    %66 = arith.truncf %65 : vector<2x8x8xf32> to vector<2x8x8xbf16>
    "tpu.trace_start"() <{level = 10 : i32, message = "bnm,bmk->bnk"}> : () -> ()
    %cst_25 = arith.constant dense<0.000000e+00> : vector<2x8x16xf32>
    %67 = tpu.matmul %66, %54, %cst_25 {dimension_numbers = #tpu.dot_dimension_numbers<[2], [1], [1], [2], [0, 0, 0, 1, 1, 2], [0], [0]>} : vector<2x8x8xbf16>, vector<2x8x16xbf16>, vector<2x8x16xf32> -> vector<2x8x16xf32>
    "tpu.trace_stop"() : () -> ()
    %68 = vector.extract_strided_slice %46 {offsets = [0, 0, 16], sizes = [2, 8, 16], strides = [1, 1, 1]} : vector<2x8x32xf32> to vector<2x8x16xf32>
    %69 = arith.truncf %68 : vector<2x8x16xf32> to vector<2x8x16xbf16>
    %70 = vector.extract_strided_slice %47 {offsets = [0, 0, 16], sizes = [2, 8, 16], strides = [1, 1, 1]} : vector<2x8x32xf32> to vector<2x8x16xf32>
    %71 = arith.truncf %70 : vector<2x8x16xf32> to vector<2x8x16xbf16>
    %72 = vector.extract_strided_slice %48 {offsets = [0, 0, 16], sizes = [2, 8, 16], strides = [1, 1, 1]} : vector<2x8x32xf32> to vector<2x8x16xf32>
    %73 = arith.truncf %72 : vector<2x8x16xf32> to vector<2x8x16xbf16>
    "tpu.trace_start"() <{level = 10 : i32, message = "bnk,bmk->bnm"}> : () -> ()
    %cst_26 = arith.constant dense<0.000000e+00> : vector<2x8x8xf32>
    %74 = tpu.matmul %69, %71, %cst_26 {dimension_numbers = #tpu.dot_dimension_numbers<[2], [2], [1], [1], [0, 0, 0, 1, 1, 1], [0], [0]>} : vector<2x8x16xbf16>, vector<2x8x16xbf16>, vector<2x8x8xf32> -> vector<2x8x8xf32>
    "tpu.trace_stop"() : () -> ()
    %cst_27 = arith.constant dense<0xFF800000> : vector<2x8xf32>
    %75 = vector.multi_reduction <maximumf>, %74, %cst_27 [2] : vector<2x8x8xf32> to vector<2x8xf32>
    %76 = vector.shape_cast %75 : vector<2x8xf32> to vector<2x8x1xf32>
    %77 = vector.broadcast %76 : vector<2x8x1xf32> to vector<2x8x8xf32>
    %78 = arith.subf %74, %77 : vector<2x8x8xf32>
    %79 = math.exp %78 : vector<2x8x8xf32>
    %cst_28 = arith.constant dense<0.000000e+00> : vector<2x8xf32>
    %80 = vector.multi_reduction <add>, %79, %cst_28 [2] : vector<2x8x8xf32> to vector<2x8xf32>
    %81 = vector.shape_cast %80 : vector<2x8xf32> to vector<2x8x1xf32>
    %82 = tpu.reciprocal %81 {approx = true} : vector<2x8x1xf32> -> vector<2x8x1xf32>
    %83 = vector.broadcast %82 : vector<2x8x1xf32> to vector<2x8x8xf32>
    %84 = arith.mulf %79, %83 : vector<2x8x8xf32>
    %85 = arith.truncf %84 : vector<2x8x8xf32> to vector<2x8x8xbf16>
    "tpu.trace_start"() <{level = 10 : i32, message = "bnm,bmk->bnk"}> : () -> ()
    %cst_29 = arith.constant dense<0.000000e+00> : vector<2x8x16xf32>
    %86 = tpu.matmul %85, %73, %cst_29 {dimension_numbers = #tpu.dot_dimension_numbers<[2], [1], [1], [2], [0, 0, 0, 1, 1, 2], [0], [0]>} : vector<2x8x8xbf16>, vector<2x8x16xbf16>, vector<2x8x16xf32> -> vector<2x8x16xf32>
    "tpu.trace_stop"() : () -> ()
    %87 = tpu.concatenate %67, %86 in 2 : vector<2x8x16xf32>, vector<2x8x16xf32> -> vector<2x8x32xf32>
    %88 = vector.shape_cast %87 : vector<2x8x32xf32> to vector<16x32xf32>
    %89 = arith.truncf %88 : vector<16x32xf32> to vector<16x32xbf16>
    %c0_30 = arith.constant 0 : index
    %c0_31 = arith.constant 0 : index
    %c0_32 = arith.constant 0 : index
    %90 = vector.load %arg6[%c0_30, %c0_31, %c0_32] : memref<1x32x32xbf16, #tpu.memory_space<vmem>>, vector<1x32x32xbf16>
    %91 = vector.shape_cast %90 : vector<1x32x32xbf16> to vector<32x32xbf16>
    %cst_33 = arith.constant dense<0.000000e+00> : vector<16x32xf32>
    %92 = tpu.matmul %89, %91, %cst_33 {dimension_numbers = #tpu.dot_dimension_numbers<[1], [0], [0], [1], [0, 0, 1, 1], [], []>} : vector<16x32xbf16>, vector<32x32xbf16>, vector<16x32xf32> -> vector<16x32xf32>
    %93 = vector.broadcast %8 : vector<1x32xf32> to vector<16x32xf32>
    %94 = arith.addf %92, %93 : vector<16x32xf32>
    %95 = arith.addf %3, %94 : vector<16x32xf32>
    %cst_34 = arith.constant dense<0.000000e+00> : vector<16xf32>
    %96 = vector.multi_reduction <add>, %95, %cst_34 [1] : vector<16x32xf32> to vector<16xf32>
    %97 = vector.shape_cast %96 : vector<16xf32> to vector<16x1xf32>
    %cst_35 = arith.constant 3.200000e+01 : f32
    %98 = vector.broadcast %cst_35 : f32 to vector<16x1xf32>
    %99 = arith.divf %97, %98 : vector<16x1xf32>
    %100 = vector.broadcast %99 : vector<16x1xf32> to vector<16x32xf32>
    %101 = arith.subf %95, %100 : vector<16x32xf32>
    %102 = arith.mulf %101, %101 : vector<16x32xf32>
    %cst_36 = arith.constant dense<0.000000e+00> : vector<16xf32>
    %103 = vector.multi_reduction <add>, %102, %cst_36 [1] : vector<16x32xf32> to vector<16xf32>
    %104 = vector.shape_cast %103 : vector<16xf32> to vector<16x1xf32>
    %cst_37 = arith.constant 3.200000e+01 : f32
    %105 = vector.broadcast %cst_37 : f32 to vector<16x1xf32>
    %106 = arith.divf %104, %105 : vector<16x1xf32>
    %107 = vector.broadcast %99 : vector<16x1xf32> to vector<16x32xf32>
    %108 = arith.subf %95, %107 : vector<16x32xf32>
    %cst_38 = arith.constant 9.99999974E-6 : f32
    %109 = vector.broadcast %cst_38 : f32 to vector<16x1xf32>
    %110 = arith.addf %106, %109 : vector<16x1xf32>
    %111 = math.rsqrt %110 : vector<16x1xf32>
    %112 = vector.broadcast %111 : vector<16x1xf32> to vector<16x32xf32>
    %113 = arith.mulf %108, %112 : vector<16x32xf32>
    %114 = vector.broadcast %9 : vector<1x32xf32> to vector<16x32xf32>
    %115 = arith.mulf %113, %114 : vector<16x32xf32>
    %116 = vector.broadcast %10 : vector<1x32xf32> to vector<16x32xf32>
    %117 = arith.addf %115, %116 : vector<16x32xf32>
    %118 = arith.truncf %117 : vector<16x32xf32> to vector<16x32xbf16>
    %c0_39 = arith.constant 0 : index
    %c0_40 = arith.constant 0 : index
    %c0_41 = arith.constant 0 : index
    %119 = vector.load %arg7[%c0_39, %c0_40, %c0_41] : memref<1x32x64xbf16, #tpu.memory_space<vmem>>, vector<1x32x64xbf16>
    %120 = vector.shape_cast %119 : vector<1x32x64xbf16> to vector<32x64xbf16>
    %cst_42 = arith.constant dense<0.000000e+00> : vector<16x64xf32>
    %121 = tpu.matmul %118, %120, %cst_42 {dimension_numbers = #tpu.dot_dimension_numbers<[1], [0], [0], [1], [0, 0, 1, 1], [], []>} : vector<16x32xbf16>, vector<32x64xbf16>, vector<16x64xf32> -> vector<16x64xf32>
    %c0_43 = arith.constant 0 : index
    %c0_44 = arith.constant 0 : index
    %c0_45 = arith.constant 0 : index
    %122 = vector.load %arg8[%c0_43, %c0_44, %c0_45] : memref<1x1x64xf32, #tpu.memory_space<vmem>>, vector<1x1x64xf32>
    %123 = vector.shape_cast %122 : vector<1x1x64xf32> to vector<1x64xf32>
    %124 = vector.broadcast %123 : vector<1x64xf32> to vector<16x64xf32>
    %125 = arith.addf %121, %124 : vector<16x64xf32>
    %cst_46 = arith.constant 5.000000e-01 : f32
    %126 = vector.broadcast %cst_46 : f32 to vector<16x64xf32>
    %127 = arith.mulf %126, %125 : vector<16x64xf32>
    %cst_47 = arith.constant 0.707106769 : f32
    %128 = vector.broadcast %cst_47 : f32 to vector<16x64xf32>
    %129 = arith.mulf %125, %128 : vector<16x64xf32>
    %130 = math.erf %129 : vector<16x64xf32>
    %cst_48 = arith.constant 1.000000e+00 : f32
    %131 = vector.broadcast %cst_48 : f32 to vector<16x64xf32>
    %132 = arith.addf %131, %130 : vector<16x64xf32>
    %133 = arith.mulf %127, %132 : vector<16x64xf32>
    %134 = arith.truncf %133 : vector<16x64xf32> to vector<16x64xbf16>
    %c0_49 = arith.constant 0 : index
    %c0_50 = arith.constant 0 : index
    %c0_51 = arith.constant 0 : index
    %135 = vector.load %arg9[%c0_49, %c0_50, %c0_51] : memref<1x64x32xbf16, #tpu.memory_space<vmem>>, vector<1x64x32xbf16>
    %136 = vector.shape_cast %135 : vector<1x64x32xbf16> to vector<64x32xbf16>
    %cst_52 = arith.constant dense<0.000000e+00> : vector<16x32xf32>
    %137 = tpu.matmul %134, %136, %cst_52 {dimension_numbers = #tpu.dot_dimension_numbers<[1], [0], [0], [1], [0, 0, 1, 1], [], []>} : vector<16x64xbf16>, vector<64x32xbf16>, vector<16x32xf32> -> vector<16x32xf32>
    %138 = vector.broadcast %11 : vector<1x32xf32> to vector<16x32xf32>
    %139 = arith.addf %137, %138 : vector<16x32xf32>
    %140 = arith.addf %95, %139 : vector<16x32xf32>
    %c0_53 = arith.constant 0 : index
    %c0_54 = arith.constant 0 : index
    %141 = vector.load %arg11[%c0_53, %c0_54] : memref<16x32xf32, #tpu.memory_space<vmem>>, vector<16x32xf32>
    tpu.vector_store %arg11[%c0_53, %c0_54], %140 {strides = array<i32>} : memref<16x32xf32, #tpu.memory_space<vmem>>, vector<16x32xf32>,
    %c1_i32 = arith.constant 1 : i32
    %142 = arith.cmpi eq, %arg0, %c1_i32 : i32
    %143 = arith.extui %142 : i1 to i32
    %c0_i32_55 = arith.constant 0 : i32
    %144 = arith.cmpi ne, %143, %c0_i32_55 : i32
    scf.if %144 {
      %c0_56 = arith.constant 0 : index
      %c0_57 = arith.constant 0 : index
      %145 = vector.load %arg10[%c0_56, %c0_57] : memref<16x32xf32, #tpu.memory_space<vmem>>, vector<16x32xf32>
      tpu.vector_store %arg10[%c0_56, %c0_57], %140 {strides = array<i32>} : memref<16x32xf32, #tpu.memory_space<vmem>>, vector<16x32xf32>,
    } else {
    }
    return
  }
  func.func @transform_0(%arg0: i32) -> (i32, i32) {
    %c0_i32 = arith.constant 0 : i32
    %c0_i32_0 = arith.constant 0 : i32
    %c0_i32_1 = arith.constant 0 : i32
    return %c0_i32, %c0_i32_0 : i32, i32
  }
  func.func @transform_1(%arg0: i32) -> (i32, i32, i32) {
    %c0_i32 = arith.constant 0 : i32
    %c0_i32_0 = arith.constant 0 : i32
    %c0_i32_1 = arith.constant 0 : i32
    return %arg0, %c0_i32, %c0_i32_0 : i32, i32, i32
  }
  func.func @transform_2(%arg0: i32) -> (i32, i32, i32) {
    %c0_i32 = arith.constant 0 : i32
    %c0_i32_0 = arith.constant 0 : i32
    %c0_i32_1 = arith.constant 0 : i32
    return %arg0, %c0_i32, %c0_i32_0 : i32, i32, i32
  }
  func.func @transform_3(%arg0: i32) -> (i32, i32, i32) {
    %c0_i32 = arith.constant 0 : i32
    %c0_i32_0 = arith.constant 0 : i32
    %c0_i32_1 = arith.constant 0 : i32
    return %arg0, %c0_i32, %c0_i32_0 : i32, i32, i32
  }
  func.func @transform_4(%arg0: i32) -> (i32, i32, i32) {
    %c0_i32 = arith.constant 0 : i32
    %c0_i32_0 = arith.constant 0 : i32
    %c0_i32_1 = arith.constant 0 : i32
    return %arg0, %c0_i32, %c0_i32_0 : i32, i32, i32
  }
  func.func @transform_5(%arg0: i32) -> (i32, i32, i32) {
    %c0_i32 = arith.constant 0 : i32
    %c0_i32_0 = arith.constant 0 : i32
    %c0_i32_1 = arith.constant 0 : i32
    return %arg0, %c0_i32, %c0_i32_0 : i32, i32, i32
  }
  func.func @transform_6(%arg0: i32) -> (i32, i32, i32) {
    %c0_i32 = arith.constant 0 : i32
    %c0_i32_0 = arith.constant 0 : i32
    %c0_i32_1 = arith.constant 0 : i32
    return %arg0, %c0_i32, %c0_i32_0 : i32, i32, i32
  }
  func.func @transform_7(%arg0: i32) -> (i32, i32, i32) {
    %c0_i32 = arith.constant 0 : i32
    %c0_i32_0 = arith.constant 0 : i32
    %c0_i32_1 = arith.constant 0 : i32
    return %arg0, %c0_i32, %c0_i32_0 : i32, i32, i32
  }
  func.func @transform_8(%arg0: i32) -> (i32, i32, i32) {
    %c0_i32 = arith.constant 0 : i32
    %c0_i32_0 = arith.constant 0 : i32
    %c0_i32_1 = arith.constant 0 : i32
    return %arg0, %c0_i32, %c0_i32_0 : i32, i32, i32
  }
  func.func @transform_9(%arg0: i32) -> (i32, i32) {
    %c0_i32 = arith.constant 0 : i32
    %c0_i32_0 = arith.constant 0 : i32
    %c0_i32_1 = arith.constant 0 : i32
    return %c0_i32, %c0_i32_0 : i32, i32
  }
}

</mosaic_0001>

<llo_original>
// kernel: tpu_custom_call.1
$region0: #{tpu_custom_call.1}
  #allocation0 [shape = 'u32[]', space=smem, size = 0x4, offset = 0x4, fixed_abs, tag = 'smem constant byte address 0x4 - core index']
  #allocation1 [shape = 'u32[72,128]{1,0:T(1,128)}', space=vmem, size = 0x9000, scoped, tag = 'internal scratch']
  #allocation2 [shape = 'f32[16,32]{1,0:T(8,128)}', space=vmem, size = 0x2000, scoped, tag = 'scratch operand']
  %s0 = inlined_call_operand.hbm [shape: f32[16,32], index: 0, kind: input, shape index: {}]
  %s1 = inlined_call_operand.vmem [shape: f32[2,6,32], index: 1, kind: input, shape index: {}]
  %s2 = inlined_call_operand.vmem [shape: bf16[2,32,32], index: 2, kind: input, shape index: {}]
  %s3 = inlined_call_operand.vmem [shape: bf16[2,32,32], index: 3, kind: input, shape index: {}]
  %s4 = inlined_call_operand.vmem [shape: bf16[2,32,32], index: 4, kind: input, shape index: {}]
  %s5 = inlined_call_operand.hbm [shape: bf16[2,32,32], index: 5, kind: input, shape index: {}]
  %s6 = inlined_call_operand.hbm [shape: bf16[2,32,64], index: 6, kind: input, shape index: {}]
  %s7 = inlined_call_operand.vmem [shape: f32[2,1,64], index: 7, kind: input, shape index: {}]
  %s8 = inlined_call_operand.vmem [shape: bf16[2,64,32], index: 8, kind: input, shape index: {}]
  %s9 = inlined_call_operand.hbm [shape: f32[16,32], index: 9, kind: output, shape index: {}]
  %s10 = sld [smem:[#allocation0]]
  $region89: #{tpu_custom_call.1} parent=0
    _
  %s12 = ssub.s32 1, %s10
  %s13 = scalar_select 0, %s12, %s10
  $region1: #{tpu_custom_call.1} parent=0
    #allocation3 [shape = 'u8[8192]{0}', space=vmem, size = 0x2000, scoped, tag = 'input window, operand 0, single buffered']
    #allocation4 [shape = 's32[2]{0}', space=sflag, size = 0x8, scoped, tag = 'scoped memory for tpu_custom_call.1']
    #allocation5 [shape = 's32[2]{0}', space=sflag, size = 0x8, scoped, tag = 'scoped memory for tpu_custom_call.1']
    #allocation6 [shape = 'u8[16384]{0}', space=vmem, size = 0x4000, scoped, tag = 'input window, operand 5']
    #allocation7 [shape = 's32[2]{0}', space=sflag, size = 0x8, scoped, tag = 'scoped memory for tpu_custom_call.1']
    #allocation8 [shape = 'u8[16384]{0}', space=vmem, size = 0x4000, scoped, tag = 'input window, operand 6']
    #allocation9 [shape = 'u8[8192]{0}', space=vmem, size = 0x2000, scoped, tag = 'output window, operand 0, single buffered']
    %14 = vsyncpa [#allocation4], 0
    %15 = vsyncpa [#allocation7], 0
    %s16 = scalar_lea.sflag [#allocation7], 1
    %17 = vsyncpa %s16, 0
    %18 = vsyncpa [#allocation5], 0
    loop: start=0, step=1, limit=4
    $region2: #{tpu_custom_call.1} parent=1 // loop_pre_header
      _
    $region3: #{tpu_custom_call.1} parent=1 // loop_header
      %s20 = sphi 0, %s24
      %p21 = scmp.ge.s32.totalorder %s20, 4
      %s28 = sphi 0, %s28
      %s30 = sphi 0, %s28
      %s31 = sphi 0, %s30
      %s45 = sphi 0, %s31
      %s51 = sphi 0, %s53
      %s54 = sphi 0, %s51
      %s55 = sphi 0, %s54
      %s71 = sphi 0, %s55
      %s77 = sphi 0, %s79
      %s80 = sphi 0, %s77
      %s81 = sphi 0, %s80
      %s97 = sphi 0, %s81
      %s103 = sphi 0, %s105
      %s106 = sphi 0, %s103
      %s107 = sphi 0, %s106
      %s123 = sphi 0, %s107
      %s129 = sphi 0, %s131
      %s132 = sphi 0, %s129
      %s133 = sphi 0, %s132
      %s149 = sphi 0, %s133
      %s155 = sphi 0, %s157
      %s158 = sphi 0, %s155
      %s159 = sphi 0, %s158
      %s175 = sphi 0, %s159
      %s181 = sphi 0, %s183
      %s184 = sphi 0, %s181
      %s185 = sphi 0, %s184
      %s201 = sphi 0, %s185
      %s207 = sphi 0, %s209
      %s210 = sphi 0, %s207
      %s211 = sphi 0, %s210
      %s227 = sphi 0, %s211
      %s233 = sphi 0, %s235
      %s236 = sphi 0, %s233
      %s237 = sphi 0, %s236
      %s253 = sphi 0, %s237
      %s257 = sphi 0, %s257
      %s259 = sphi 0, %s257
      %s260 = sphi 0, %s259
      %s274 = sphi 0, %s260
    $region4: #{tpu_custom_call.1} parent=1 // loop_header_branch
      %23 = sbr.rel (%p21) target = $region8
    $region5: #{tpu_custom_call.1} parent=1 // loop_body
      %s25 = ssub.s32 %s20, 1
      %s26 = ssub.s32 %s20, 2
      %s27 = sadd.s32 %s20, 1
      %s29 = sadd.s32 %s28, 1
      %p32 = scmp.eq.s32.totalorder %s20, 1
      %p33 = scmp.ne.s32.totalorder %s28, %s30
      %p34 = scmp.eq.s32.totalorder %s20, 0
      %p35 = por %p33, %p34
      %p36 = scmp.ne.s32.totalorder %s28, %s30
      %p37 = scmp.eq.s32.totalorder %s25, 1
      %p38 = por %p36, %p37
      %p39 = scmp.ne.s32.totalorder %s30, %s31
      %p40 = scmp.eq.s32.totalorder %s25, 0
      %p41 = por %p39, %p40
      %p42 = scmp.ne.s32.totalorder %s30, %s31
      %p43 = scmp.eq.s32.totalorder %s26, 1
      %p44 = por %p42, %p43
      %p46 = scmp.ne.s32.totalorder %s31, %s45
      %p47 = scmp.eq.s32.totalorder %s26, 0
      %p48 = por %p46, %p47
      %s49 = ssub.s32 %s20, %s27
      %p50 = scmp.eq.s32.totalorder %s49, 0
      %s52 = sadd.s32 %s51, 1
      %s53 = scalar_select %p50, %s51, %s52
      %p56 = pneg %p50
      %p57 = scmp.eq.s32.totalorder %s20, 1
      %p58 = por %p56, %p57
      %p59 = scmp.ne.s32.totalorder %s51, %s54
      %p60 = scmp.eq.s32.totalorder %s20, 0
      %p61 = por %p59, %p60
      %p62 = scmp.ne.s32.totalorder %s51, %s54
      %p63 = scmp.eq.s32.totalorder %s25, 1
      %p64 = por %p62, %p63
      %p65 = scmp.ne.s32.totalorder %s54, %s55
      %p66 = scmp.eq.s32.totalorder %s25, 0
      %p67 = por %p65, %p66
      %p68 = scmp.ne.s32.totalorder %s54, %s55
      %p69 = scmp.eq.s32.totalorder %s26, 1
      %p70 = por %p68, %p69
      %p72 = scmp.ne.s32.totalorder %s55, %s71
      %p73 = scmp.eq.s32.totalorder %s26, 0
      %p74 = por %p72, %p73
      %s75 = ssub.s32 %s20, %s27
      %p76 = scmp.eq.s32.totalorder %s75, 0
      %s78 = sadd.s32 %s77, 1
      %s79 = scalar_select %p76, %s77, %s78
      %p82 = pneg %p76
      %p83 = scmp.eq.s32.totalorder %s20, 1
      %p84 = por %p82, %p83
      %p85 = scmp.ne.s32.totalorder %s77, %s80
      %p86 = scmp.eq.s32.totalorder %s20, 0
      %p87 = por %p85, %p86
      %p88 = scmp.ne.s32.totalorder %s77, %s80
      %p89 = scmp.eq.s32.totalorder %s25, 1
      %p90 = por %p88, %p89
      %p91 = scmp.ne.s32.totalorder %s80, %s81
      %p92 = scmp.eq.s32.totalorder %s25, 0
      %p93 = por %p91, %p92
      %p94 = scmp.ne.s32.totalorder %s80, %s81
      %p95 = scmp.eq.s32.totalorder %s26, 1
      %p96 = por %p94, %p95
      %p98 = scmp.ne.s32.totalorder %s81, %s97
      %p99 = scmp.eq.s32.totalorder %s26, 0
      %p100 = por %p98, %p99
      %s101 = ssub.s32 %s20, %s27
      %p102 = scmp.eq.s32.totalorder %s101, 0
      %s104 = sadd.s32 %s103, 1
      %s105 = scalar_select %p102, %s103, %s104
      %p108 = pneg %p102
      %p109 = scmp.eq.s32.totalorder %s20, 1
      %p110 = por %p108, %p109
      %p111 = scmp.ne.s32.totalorder %s103, %s106
      %p112 = scmp.eq.s32.totalorder %s20, 0
      %p113 = por %p111, %p112
      %p114 = scmp.ne.s32.totalorder %s103, %s106
      %p115 = scmp.eq.s32.totalorder %s25, 1
      %p116 = por %p114, %p115
      %p117 = scmp.ne.s32.totalorder %s106, %s107
      %p118 = scmp.eq.s32.totalorder %s25, 0
      %p119 = por %p117, %p118
      %p120 = scmp.ne.s32.totalorder %s106, %s107
      %p121 = scmp.eq.s32.totalorder %s26, 1
      %p122 = por %p120, %p121
      %p124 = scmp.ne.s32.totalorder %s107, %s123
      %p125 = scmp.eq.s32.totalorder %s26, 0
      %p126 = por %p124, %p125
      %s127 = ssub.s32 %s20, %s27
      %p128 = scmp.eq.s32.totalorder %s127, 0
      %s130 = sadd.s32 %s129, 1
      %s131 = scalar_select %p128, %s129, %s130
      %p134 = pneg %p128
      %p135 = scmp.eq.s32.totalorder %s20, 1
      %p136 = por %p134, %p135
      %p137 = scmp.ne.s32.totalorder %s129, %s132
      %p138 = scmp.eq.s32.totalorder %s20, 0
      %p139 = por %p137, %p138
      %p140 = scmp.ne.s32.totalorder %s129, %s132
      %p141 = scmp.eq.s32.totalorder %s25, 1
      %p142 = por %p140, %p141
      %p143 = scmp.ne.s32.totalorder %s132, %s133
      %p144 = scmp.eq.s32.totalorder %s25, 0
      %p145 = por %p143, %p144
      %p146 = scmp.ne.s32.totalorder %s132, %s133
      %p147 = scmp.eq.s32.totalorder %s26, 1
      %p148 = por %p146, %p147
      %p150 = scmp.ne.s32.totalorder %s133, %s149
      %p151 = scmp.eq.s32.totalorder %s26, 0
      %p152 = por %p150, %p151
      %s153 = ssub.s32 %s20, %s27
      %p154 = scmp.eq.s32.totalorder %s153, 0
      %s156 = sadd.s32 %s155, 1
      %s157 = scalar_select %p154, %s155, %s156
      %p160 = pneg %p154
      %p161 = scmp.eq.s32.totalorder %s20, 1
      %p162 = por %p160, %p161
      %p163 = scmp.ne.s32.totalorder %s155, %s158
      %p164 = scmp.eq.s32.totalorder %s20, 0
      %p165 = por %p163, %p164
      %p166 = scmp.ne.s32.totalorder %s155, %s158
      %p167 = scmp.eq.s32.totalorder %s25, 1
      %p168 = por %p166, %p167
      %p169 = scmp.ne.s32.totalorder %s158, %s159
      %p170 = scmp.eq.s32.totalorder %s25, 0
      %p171 = por %p169, %p170
      %p172 = scmp.ne.s32.totalorder %s158, %s159
      %p173 = scmp.eq.s32.totalorder %s26, 1
      %p174 = por %p172, %p173
      %p176 = scmp.ne.s32.totalorder %s159, %s175
      %p177 = scmp.eq.s32.totalorder %s26, 0
      %p178 = por %p176, %p177
      %s179 = ssub.s32 %s20, %s27
      %p180 = scmp.eq.s32.totalorder %s179, 0
      %s182 = sadd.s32 %s181, 1
      %s183 = scalar_select %p180, %s181, %s182
      %p186 = pneg %p180
      %p187 = scmp.eq.s32.totalorder %s20, 1
      %p188 = por %p186, %p187
      %p189 = scmp.ne.s32.totalorder %s181, %s184
      %p190 = scmp.eq.s32.totalorder %s20, 0
      %p191 = por %p189, %p190
      %p192 = scmp.ne.s32.totalorder %s181, %s184
      %p193 = scmp.eq.s32.totalorder %s25, 1
      %p194 = por %p192, %p193
      %p195 = scmp.ne.s32.totalorder %s184, %s185
      %p196 = scmp.eq.s32.totalorder %s25, 0
      %p197 = por %p195, %p196
      %p198 = scmp.ne.s32.totalorder %s184, %s185
      %p199 = scmp.eq.s32.totalorder %s26, 1
      %p200 = por %p198, %p199
      %p202 = scmp.ne.s32.totalorder %s185, %s201
      %p203 = scmp.eq.s32.totalorder %s26, 0
      %p204 = por %p202, %p203
      %s205 = ssub.s32 %s20, %s27
      %p206 = scmp.eq.s32.totalorder %s205, 0
      %s208 = sadd.s32 %s207, 1
      %s209 = scalar_select %p206, %s207, %s208
      %p212 = pneg %p206
      %p213 = scmp.eq.s32.totalorder %s20, 1
      %p214 = por %p212, %p213
      %p215 = scmp.ne.s32.totalorder %s207, %s210
      %p216 = scmp.eq.s32.totalorder %s20, 0
      %p217 = por %p215, %p216
      %p218 = scmp.ne.s32.totalorder %s207, %s210
      %p219 = scmp.eq.s32.totalorder %s25, 1
      %p220 = por %p218, %p219
      %p221 = scmp.ne.s32.totalorder %s210, %s211
      %p222 = scmp.eq.s32.totalorder %s25, 0
      %p223 = por %p221, %p222
      %p224 = scmp.ne.s32.totalorder %s210, %s211
      %p225 = scmp.eq.s32.totalorder %s26, 1
      %p226 = por %p224, %p225
      %p228 = scmp.ne.s32.totalorder %s211, %s227
      %p229 = scmp.eq.s32.totalorder %s26, 0
      %p230 = por %p228, %p229
      %s231 = ssub.s32 %s20, %s27
      %p232 = scmp.eq.s32.totalorder %s231, 0
      %s234 = sadd.s32 %s233, 1
      %s235 = scalar_select %p232, %s233, %s234
      %p238 = pneg %p232
      %p239 = scmp.eq.s32.totalorder %s20, 1
      %p240 = por %p238, %p239
      %p241 = scmp.ne.s32.totalorder %s233, %s236
      %p242 = scmp.eq.s32.totalorder %s20, 0
      %p243 = por %p241, %p242
      %p244 = scmp.ne.s32.totalorder %s233, %s236
      %p245 = scmp.eq.s32.totalorder %s25, 1
      %p246 = por %p244, %p245
      %p247 = scmp.ne.s32.totalorder %s236, %s237
      %p248 = scmp.eq.s32.totalorder %s25, 0
      %p249 = por %p247, %p248
      %p250 = scmp.ne.s32.totalorder %s236, %s237
      %p251 = scmp.eq.s32.totalorder %s26, 1
      %p252 = por %p250, %p251
      %p254 = scmp.ne.s32.totalorder %s237, %s253
      %p255 = scmp.eq.s32.totalorder %s26, 0
      %p256 = por %p254, %p255
      %s258 = sadd.s32 %s257, 1
      %p261 = scmp.eq.s32.totalorder %s20, 1
      %p262 = scmp.ne.s32.totalorder %s257, %s259
      %p263 = scmp.eq.s32.totalorder %s20, 0
      %p264 = por %p262, %p263
      %p265 = scmp.ne.s32.totalorder %s257, %s259
      %p266 = scmp.eq.s32.totalorder %s25, 1
      %p267 = por %p265, %p266
      %p268 = scmp.ne.s32.totalorder %s259, %s260
      %p269 = scmp.eq.s32.totalorder %s25, 0
      %p270 = por %p268, %p269
      %p271 = scmp.ne.s32.totalorder %s259, %s260
      %p272 = scmp.eq.s32.totalorder %s26, 1
      %p273 = por %p271, %p272
      %p275 = scmp.ne.s32.totalorder %s260, %s274
      %p276 = scmp.eq.s32.totalorder %s26, 0
      %p277 = por %p275, %p276
      %p278 = scmp.le.s32.totalorder 1, %s20
      %p279 = scmp.lt.s32.totalorder %s20, 3
      %p280 = pnand %p278, %p279
      %p281 = pneg %p280
      // Predicated region
      $region9: #{tpu_custom_call.1} parent=5 // pred_check
        _
      $region10: #{tpu_custom_call.1} parent=5 // pred_check_branch
        %283 = sbr.rel (%p280) target = $region12
      $region11: #{tpu_custom_call.1} parent=5 // pred_region
        %s284 = ssub.s32 %s20, 1
        // Predicated region
        $region13: #{tpu_custom_call.1} parent=11 // pred_check
          %p285 = pneg %p41
        $region14: #{tpu_custom_call.1} parent=11 // pred_check_branch
          %287 = sbr.rel (%p285) target = $region16
        $region15: #{tpu_custom_call.1} parent=11 // pred_region
          %289 = vsyncadd [#allocation4], 0
          %s290 = sshll.u32 %s0, 4
          %s291 = int_to_ptr.hbm [resolvable:$true] %s290
          %s292 = sshll.u32 [#allocation3], 4
          %s293 = int_to_ptr.vmem [resolvable:$true] %s292
          %298 = dma.hbm_to_vmem [thread:$0]  %s291, 256, %s293, [#allocation4], 128, 128, 8
        $region16: #{tpu_custom_call.1} parent=11 // pred_fallthru
          _
      $region12: #{tpu_custom_call.1} parent=5 // pred_fallthru
        _
      %p299 = scmp.lt.s32.totalorder %s20, 2
      // Predicated region
      $region17: #{tpu_custom_call.1} parent=5 // pred_check
        %p300 = pneg %p299
      $region18: #{tpu_custom_call.1} parent=5 // pred_check_branch
        %302 = sbr.rel (%p300) target = $region20
      $region19: #{tpu_custom_call.1} parent=5 // pred_region
        // Predicated region
        $region21: #{tpu_custom_call.1} parent=19 // pred_check
          %p303 = pneg %p61
        $region22: #{tpu_custom_call.1} parent=19 // pred_check_branch
          %305 = sbr.rel (%p303) target = $region24
        $region23: #{tpu_custom_call.1} parent=19 // pred_region
          %p306 = scmp.lt.s32.totalorder %s20, 1
          %s307 = scalar_select %p306, %s20, 1
          %s308 = smul.addr %s307, 8
          %s309 = scalar_lea.vmem %s1, %s308
        $region24: #{tpu_custom_call.1} parent=19 // pred_fallthru
          _
        // Predicated region
        $region25: #{tpu_custom_call.1} parent=19 // pred_check
          %p310 = pneg %p87
        $region26: #{tpu_custom_call.1} parent=19 // pred_check_branch
          %312 = sbr.rel (%p310) target = $region28
        $region27: #{tpu_custom_call.1} parent=19 // pred_region
          %p313 = scmp.lt.s32.totalorder %s20, 1
          %s314 = scalar_select %p313, %s20, 1
          %s315 = smul.addr %s314, 4
          %s316 = smul.addr %s315, 4
          %s317 = scalar_lea.vmem %s2, %s316
        $region28: #{tpu_custom_call.1} parent=19 // pred_fallthru
          _
        // Predicated region
        $region29: #{tpu_custom_call.1} parent=19 // pred_check
          %p318 = pneg %p113
        $region30: #{tpu_custom_call.1} parent=19 // pred_check_branch
          %320 = sbr.rel (%p318) target = $region32
        $region31: #{tpu_custom_call.1} parent=19 // pred_region
          %p321 = scmp.lt.s32.totalorder %s20, 1
          %s322 = scalar_select %p321, %s20, 1
          %s323 = smul.addr %s322, 4
          %s324 = smul.addr %s323, 4
          %s325 = scalar_lea.vmem %s3, %s324
        $region32: #{tpu_custom_call.1} parent=19 // pred_fallthru
          _
        // Predicated region
        $region33: #{tpu_custom_call.1} parent=19 // pred_check
          %p326 = pneg %p139
        $region34: #{tpu_custom_call.1} parent=19 // pred_check_branch
          %328 = sbr.rel (%p326) target = $region36
        $region35: #{tpu_custom_call.1} parent=19 // pred_region
          %p329 = scmp.lt.s32.totalorder %s20, 1
          %s330 = scalar_select %p329, %s20, 1
          %s331 = smul.addr %s330, 4
          %s332 = smul.addr %s331, 4
          %s333 = scalar_lea.vmem %s4, %s332
        $region36: #{tpu_custom_call.1} parent=19 // pred_fallthru
          _
        // Predicated region
        $region37: #{tpu_custom_call.1} parent=19 // pred_check
          %p334 = pneg %p165
        $region38: #{tpu_custom_call.1} parent=19 // pred_check_branch
          %336 = sbr.rel (%p334) target = $region40
        $region39: #{tpu_custom_call.1} parent=19 // pred_region
          %s337 = sand.u32 %s20, 1
          %s338 = scalar_lea.sflag [#allocation7], %s337
          %s339 = sand.u32 %s155, 1
          %s340 = smul.addr %s339, 16
          %s341 = scalar_lea.vmem [#allocation6], %s340
          %343 = vsyncadd %s338, 0
          %s344 = smul.addr %s20, 4
          %s345 = smul.addr %s344, 4
          %s346 = scalar_lea.hbm %s5, %s345
          %s347 = sshll.u32 %s346, 4
          %s348 = int_to_ptr.hbm [resolvable:$true] %s347
          %s349 = sshll.u32 %s341, 4
          %s350 = int_to_ptr.vmem [resolvable:$true] %s349
          %355 = dma.hbm_to_vmem [thread:$0]  %s348, 256, %s350, %s338, 64, 64, 4
        $region40: #{tpu_custom_call.1} parent=19 // pred_fallthru
          _
        // Predicated region
        $region41: #{tpu_custom_call.1} parent=19 // pred_check
          %p356 = pneg %p191
        $region42: #{tpu_custom_call.1} parent=19 // pred_check_branch
          %358 = sbr.rel (%p356) target = $region44
        $region43: #{tpu_custom_call.1} parent=19 // pred_region
          %s359 = sand.u32 %s20, 1
          %s360 = scalar_lea.sflag [#allocation7], %s359
          %s361 = sand.u32 %s181, 1
          %s362 = smul.addr %s361, 16
          %s363 = scalar_lea.vmem [#allocation8], %s362
          %365 = vsyncadd %s360, 0
          %s366 = smul.addr %s20, 4
          %s367 = smul.addr %s366, 4
          %s368 = scalar_lea.hbm %s6, %s367
          %s369 = sshll.u32 %s368, 4
          %s370 = int_to_ptr.hbm [resolvable:$true] %s369
          %s371 = sshll.u32 %s363, 4
          %s372 = int_to_ptr.vmem [resolvable:$true] %s371
          %377 = dma.hbm_to_vmem [thread:$0]  %s370, 256, %s372, %s360, 64, 64, 4
        $region44: #{tpu_custom_call.1} parent=19 // pred_fallthru
          _
        // Predicated region
        $region45: #{tpu_custom_call.1} parent=19 // pred_check
          %p378 = pneg %p217
        $region46: #{tpu_custom_call.1} parent=19 // pred_check_branch
          %380 = sbr.rel (%p378) target = $region48
        $region47: #{tpu_custom_call.1} parent=19 // pred_region
          %p381 = scmp.lt.s32.totalorder %s20, 1
          %s382 = scalar_select %p381, %s20, 1
          %s383 = scalar_lea.vmem %s7, %s382
        $region48: #{tpu_custom_call.1} parent=19 // pred_fallthru
          _
        // Predicated region
        $region49: #{tpu_custom_call.1} parent=19 // pred_check
          %p384 = pneg %p243
        $region50: #{tpu_custom_call.1} parent=19 // pred_check_branch
          %386 = sbr.rel (%p384) target = $region52
        $region51: #{tpu_custom_call.1} parent=19 // pred_region
          %p387 = scmp.lt.s32.totalorder %s20, 1
          %s388 = scalar_select %p387, %s20, 1
          %s389 = smul.addr %s388, 8
          %s390 = smul.addr %s389, 4
          %s391 = scalar_lea.vmem %s8, %s390
        $region52: #{tpu_custom_call.1} parent=19 // pred_fallthru
          _
      $region20: #{tpu_custom_call.1} parent=5 // pred_fallthru
        _
      %p392 = scmp.le.s32.totalorder 1, %s20
      %p393 = scmp.lt.s32.totalorder %s20, 3
      %p394 = pnand %p392, %p393
      %p395 = pneg %p394
      // Predicated region
      $region53: #{tpu_custom_call.1} parent=5 // pred_check
        _
      $region54: #{tpu_custom_call.1} parent=5 // pred_check_branch
        %397 = sbr.rel (%p394) target = $region56
      $region55: #{tpu_custom_call.1} parent=5 // pred_region
        %s398 = ssub.s32 %s20, 1
        // Predicated region
        $region57: #{tpu_custom_call.1} parent=55 // pred_check
          %p399 = pneg %p41
        $region58: #{tpu_custom_call.1} parent=55 // pred_check_branch
          %401 = sbr.rel (%p399) target = $region60
        $region59: #{tpu_custom_call.1} parent=55 // pred_region
          %403 = dma.done [#allocation4], 256
        $region60: #{tpu_custom_call.1} parent=55 // pred_fallthru
          _
        %s404 = sand.u32 %s25, 1
        %s405 = scalar_lea.sflag [#allocation7], %s404
        %s406 = sand.u32 %s158, 1
        %s407 = smul.addr %s406, 16
        %s408 = scalar_lea.vmem [#allocation6], %s407
        // Predicated region
        $region61: #{tpu_custom_call.1} parent=55 // pred_check
          %p409 = pneg %p171
        $region62: #{tpu_custom_call.1} parent=55 // pred_check_branch
          %411 = sbr.rel (%p409) target = $region64
        $region63: #{tpu_custom_call.1} parent=55 // pred_region
          %413 = dma.done %s405, 256
        $region64: #{tpu_custom_call.1} parent=55 // pred_fallthru
          _
        %s414 = sand.u32 %s25, 1
        %s415 = scalar_lea.sflag [#allocation7], %s414
        %s416 = sand.u32 %s184, 1
        %s417 = smul.addr %s416, 16
        %s418 = scalar_lea.vmem [#allocation8], %s417
        // Predicated region
        $region65: #{tpu_custom_call.1} parent=55 // pred_check
          %p419 = pneg %p197
        $region66: #{tpu_custom_call.1} parent=55 // pred_check_branch
          %421 = sbr.rel (%p419) target = $region68
        $region67: #{tpu_custom_call.1} parent=55 // pred_region
          %423 = dma.done %s415, 256
        $region68: #{tpu_custom_call.1} parent=55 // pred_fallthru
          _
        %p424 = pneg %p41
        %p425 = pneg %p38
        %p426 = scmp.lt.s32.totalorder %s25, 1
        %s427 = scalar_select %p426, %s25, 1
        %s428 = smul.addr %s427, 8
        %s429 = scalar_lea.vmem %s1, %s428
        %p430 = pneg %p67
        %p431 = pneg %p64
        %p432 = scmp.lt.s32.totalorder %s25, 1
        %s433 = scalar_select %p432, %s25, 1
        %s434 = smul.addr %s433, 4
        %s435 = smul.addr %s434, 4
        %s436 = scalar_lea.vmem %s2, %s435
        %p437 = pneg %p93
        %p438 = pneg %p90
        %p439 = scmp.lt.s32.totalorder %s25, 1
        %s440 = scalar_select %p439, %s25, 1
        %s441 = smul.addr %s440, 4
        %s442 = smul.addr %s441, 4
        %s443 = scalar_lea.vmem %s3, %s442
        %p444 = pneg %p119
        %p445 = pneg %p116
        %p446 = scmp.lt.s32.totalorder %s25, 1
        %s447 = scalar_select %p446, %s25, 1
        %s448 = smul.addr %s447, 4
        %s449 = smul.addr %s448, 4
        %s450 = scalar_lea.vmem %s4, %s449
        %p451 = pneg %p145
        %p452 = pneg %p142
        %s453 = sand.u32 %s25, 1
        %s454 = scalar_lea.sflag [#allocation7], %s453
        %s455 = sand.u32 %s158, 1
        %s456 = smul.addr %s455, 16
        %s457 = scalar_lea.vmem [#allocation6], %s456
        %p458 = pneg %p171
        %p459 = pneg %p168
        %s460 = sand.u32 %s25, 1
        %s461 = scalar_lea.sflag [#allocation7], %s460
        %s462 = sand.u32 %s184, 1
        %s463 = smul.addr %s462, 16
        %s464 = scalar_lea.vmem [#allocation8], %s463
        %p465 = pneg %p197
        %p466 = pneg %p194
        %p467 = scmp.lt.s32.totalorder %s25, 1
        %s468 = scalar_select %p467, %s25, 1
        %s469 = scalar_lea.vmem %s7, %s468
        %p470 = pneg %p223
        %p471 = pneg %p220
        %p472 = scmp.lt.s32.totalorder %s25, 1
        %s473 = scalar_select %p472, %s25, 1
        %s474 = smul.addr %s473, 8
        %s475 = smul.addr %s474, 4
        %s476 = scalar_lea.vmem %s8, %s475
        %p477 = pneg %p249
        %p478 = pneg %p246
        %p479 = pneg %p270
        %p480 = pneg %p267
        %p481 = scmp.lt.s32.totalorder %s25, 1
        %s482 = scalar_select %p481, %s25, 1
        %s483 = smul.addr %s482, 8
        %s484 = scalar_lea.vmem %s1, %s483
        %p485 = scmp.lt.s32.totalorder %s25, 1
        %s486 = scalar_select %p485, %s25, 1
        %s487 = smul.addr %s486, 4
        %s488 = smul.addr %s487, 4
        %s489 = scalar_lea.vmem %s2, %s488
        %p490 = scmp.lt.s32.totalorder %s25, 1
        %s491 = scalar_select %p490, %s25, 1
        %s492 = smul.addr %s491, 4
        %s493 = smul.addr %s492, 4
        %s494 = scalar_lea.vmem %s3, %s493
        %p495 = scmp.lt.s32.totalorder %s25, 1
        %s496 = scalar_select %p495, %s25, 1
        %s497 = smul.addr %s496, 4
        %s498 = smul.addr %s497, 4
        %s499 = scalar_lea.vmem %s4, %s498
        %p500 = scmp.lt.s32.totalorder %s25, 1
        %s501 = scalar_select %p500, %s25, 1
        %s502 = scalar_lea.vmem %s7, %s501
        %p503 = scmp.lt.s32.totalorder %s25, 1
        %s504 = scalar_select %p503, %s25, 1
        %s505 = smul.addr %s504, 8
        %s506 = smul.addr %s505, 4
        %s507 = scalar_lea.vmem %s8, %s506
        %p509 = scmp.eq.s32.totalorder %s25, 0
        // Predicated region
        $region69: #{tpu_custom_call.1} parent=55 // pred_check
          %p510 = pneg %p509
        $region70: #{tpu_custom_call.1} parent=55 // pred_check_branch
          %512 = sbr.rel (%p510) target = $region72
        $region71: #{tpu_custom_call.1} parent=55 // pred_region
          %v513 = vld [vmem:[#allocation3] sm:$0xff]
          %v514 = vld [vmem:[#allocation3 + $0x8] sm:$0xff]
          %vm515 = vcmask 261120
          %516 = vst.msk [vmem:[#allocation2] sm:$0xff] %vm515, %v513
          %517 = vst.msk [vmem:[#allocation2 + $0x8] sm:$0xff] %vm515, %v514
        $region72: #{tpu_custom_call.1} parent=55 // pred_fallthru
          _
        %v518 = vld [vmem:[#allocation2] sm:$0xff]
        %v519 = vld [vmem:[#allocation2 + $0x8] sm:$0xff]
        %v520 = vld [vmem:[%s484] sm:$0x3f]
        %vm521 = vcmask 261120
        %v522 = vsel %vm521, %v518, 0.0
        %523 = vadd.xlane.f32.xlu0 %v522
        %v524 = vpop.xlane.xlu0 %523
        %v525 = vsel %vm521, %v519, 0.0
        %526 = vadd.xlane.f32.xlu0 %v525
        %v527 = vpop.xlane.xlu0 %526
        %v528 = vrcp.pop 32.0
        %v529 = vmul.f32 32.0, %v528
        %v530 = vsub.f32 1.0, %v529
        %v531 = vmul.f32 %v528, %v530
        %v532 = vadd.f32 %v528, %v531
        %vm533 = vweird.f32 %v528
        %v534 = vsel %vm533, %v528, %v532
        %v535 = vmul.f32 %v524, %v534
        %v536 = vmul.f32 %v527, %v534
        %v537 = vsub.f32 %v518, %v535
        %v538 = vsub.f32 %v519, %v536
        %v539 = vmul.f32 %v537, %v537
        %v540 = vmul.f32 %v538, %v538
        %v541 = vsel %vm521, %v539, 0.0
        %542 = vadd.xlane.f32.xlu0 %v541
        %v543 = vpop.xlane.xlu0 %542
        %v544 = vsel %vm521, %v540, 0.0
        %545 = vadd.xlane.f32.xlu0 %v544
        %v546 = vpop.xlane.xlu0 %545
        %v547 = vmul.f32 %v543, %v534
        %v548 = vmul.f32 %v546, %v534
        %v549 = vadd.f32 %v547, 1e-05
        %v550 = vadd.f32 %v548, 1e-05
        %v551 = vrsqrt.pop %v549
        %v552 = vmul.f32 %v551, %v549
        %v553 = vmul.f32 %v552, %v551
        %v554 = vmul.f32 0.5, %v553
        %v555 = vsub.f32 1.5, %v554
        %v556 = vmul.f32 %v551, %v555
        %vm557 = vweird.f32 %v549
        %vm558 = vweird.f32 %v551
        %vm559 = vmor %vm557, %vm558
        %v560 = vsel %vm559, %v551, %v556
        %v561 = vrsqrt.pop %v550
        %v562 = vmul.f32 %v561, %v550
        %v563 = vmul.f32 %v562, %v561
        %v564 = vmul.f32 0.5, %v563
        %v565 = vsub.f32 1.5, %v564
        %v566 = vmul.f32 %v561, %v565
        %vm567 = vweird.f32 %v550
        %vm568 = vweird.f32 %v561
        %vm569 = vmor %vm567, %vm568
        %v570 = vsel %vm569, %v561, %v566
        %v571 = vmul.f32 %v537, %v560
        %v572 = vmul.f32 %v538, %v570
        %v573 = vperm.slane %v520, 0
        %v574 = vmul.f32 %v571, %v573
        %v575 = vmul.f32 %v572, %v573
        %v576 = vperm.slane %v520, 1
        %v577 = vadd.f32 %v574, %v576
        %v578 = vadd.f32 %v575, %v576
        %v579 = vpack.c.bf16 %v578, %v577
        %v580 = vld [vmem:[%s489] sm:$0xf]
        %v581 = vld [vmem:[%s489 + $0x4] sm:$0xf]
        %v582 = vld [vmem:[%s489 + $0x8] sm:$0xf]
        %v583 = vld [vmem:[%s489 + $0xc] sm:$0xf]
        %v588 = vunpack.c.l.b16 %v580
        %v589 = vunpack.c.l.b16 %v581
        %v590 = vunpack.c.l.b16 %v582
        %v591 = vunpack.c.l.b16 %v583
        %v592 = vpack.c.b16 %v589, %v588
        %v593 = vpack.c.b16 %v591, %v590
        %v597 = vsel %vm521, %v579, 0
        %599 = vmatpush.bf16.msra.mxu0 0
        %600 = vmatpush.bf16.msra.mxu0 0
        %601 = vmatpush.bf16.msra.mxu0 0
        %602 = vmatpush.bf16.msra.mxu0 0
        %603 = vmatpush.bf16.msra.mxu0 0
        %604 = vmatpush.bf16.msra.mxu0 0
        %605 = vmatpush.bf16.msra.mxu0 %v593
        %606 = vmatpush.bf16.msra.mxu0 %v592
        %607 = vmatmul.bf16.gmra.mxu0 %v597
        %v608 = vpop.f32.mrf.mxu0
        %v609 = vadd.f32 0.0, %v608
        %v610 = vpop.f32.mrf.mxu0
        %v611 = vadd.f32 0.0, %v610
        %612 = vdwg.mxu0
        %v613 = vmul.f32 %v609, 0.25
        %v614 = vmul.f32 %v611, 0.25
        %v615 = vld [vmem:[%s494] sm:$0xf]
        %v616 = vld [vmem:[%s494 + $0x4] sm:$0xf]
        %v617 = vld [vmem:[%s494 + $0x8] sm:$0xf]
        %v618 = vld [vmem:[%s494 + $0xc] sm:$0xf]
        %v623 = vunpack.c.l.b16 %v615
        %v624 = vunpack.c.l.b16 %v616
        %v625 = vunpack.c.l.b16 %v617
        %v626 = vunpack.c.l.b16 %v618
        %v627 = vpack.c.b16 %v624, %v623
        %v628 = vpack.c.b16 %v626, %v625
        %631 = vmatpush.bf16.msra.mxu0 0
        %632 = vmatpush.bf16.msra.mxu0 0
        %633 = vmatpush.bf16.msra.mxu0 0
        %634 = vmatpush.bf16.msra.mxu0 0
        %635 = vmatpush.bf16.msra.mxu0 0
        %636 = vmatpush.bf16.msra.mxu0 0
        %637 = vmatpush.bf16.msra.mxu0 %v628
        %638 = vmatpush.bf16.msra.mxu0 %v627
        %639 = vmatmul.bf16.gmra.mxu0 %v597
        %v640 = vpop.f32.mrf.mxu0
        %v641 = vadd.f32 0.0, %v640
        %v642 = vpop.f32.mrf.mxu0
        %v643 = vadd.f32 0.0, %v642
        %644 = vdwg.mxu0
        %v645 = vld [vmem:[%s499] sm:$0xf]
        %v646 = vld [vmem:[%s499 + $0x4] sm:$0xf]
        %v647 = vld [vmem:[%s499 + $0x8] sm:$0xf]
        %v648 = vld [vmem:[%s499 + $0xc] sm:$0xf]
        %v653 = vunpack.c.l.b16 %v645
        %v654 = vunpack.c.l.b16 %v646
        %v655 = vunpack.c.l.b16 %v647
        %v656 = vunpack.c.l.b16 %v648
        %v657 = vpack.c.b16 %v654, %v653
        %v658 = vpack.c.b16 %v656, %v655
        %661 = vmatpush.bf16.msra.mxu0 0
        %662 = vmatpush.bf16.msra.mxu0 0
        %663 = vmatpush.bf16.msra.mxu0 0
        %664 = vmatpush.bf16.msra.mxu0 0
        %665 = vmatpush.bf16.msra.mxu0 0
        %666 = vmatpush.bf16.msra.mxu0 0
        %667 = vmatpush.bf16.msra.mxu0 %v658
        %668 = vmatpush.bf16.msra.mxu0 %v657
        %669 = vmatmul.bf16.gmra.mxu0 %v597
        %v670 = vpop.f32.mrf.mxu0
        %v671 = vadd.f32 0.0, %v670
        %v672 = vpop.f32.mrf.mxu0
        %v673 = vadd.f32 0.0, %v672
        %674 = vdwg.mxu0
        %v675 = vpack.c.bf16 %v613, %v613
        %v676 = vpack.c.bf16 %v614, %v614
        %v677 = vpack.c.bf16 %v641, %v641
        %v678 = vpack.c.bf16 %v643, %v643
        %v679 = vpack.c.bf16 %v671, %v671
        %v680 = vpack.c.bf16 %v673, %v673
        %vm681 = vcmask 130048
        %v683 = vsel %vm681, %v675, 0
        %v686 = vsel %vm681, %v677, 0
        %688 = vmatpush.bf16.xpose.msra.mxu0 0
        %689 = vmatpush.bf16.xpose.msra.mxu0 0
        %690 = vmatpush.bf16.xpose.msra.mxu0 0
        %691 = vmatpush.bf16.xpose.msra.mxu0 0
        %692 = vmatpush.bf16.xpose.msra.mxu0 0
        %693 = vmatpush.bf16.xpose.msra.mxu0 0
        %694 = vmatpush.bf16.xpose.msra.mxu0 0
        %695 = vmatpush.bf16.xpose.msra.mxu0 %v686
        %696 = vmatmul.bf16.gmra.mxu0 %v683
        %v697 = vpop.f32.mrf.mxu0
        %v698 = vadd.f32 0.0, %v697
        %v699 = vpop.f32.mrf.mxu0
        %700 = vdwg.mxu0
        %v702 = vsel %vm681, %v676, 0
        %v705 = vsel %vm681, %v678, 0
        %707 = vmatpush.bf16.xpose.msra.mxu0 0
        %708 = vmatpush.bf16.xpose.msra.mxu0 0
        %709 = vmatpush.bf16.xpose.msra.mxu0 0
        %710 = vmatpush.bf16.xpose.msra.mxu0 0
        %711 = vmatpush.bf16.xpose.msra.mxu0 0
        %712 = vmatpush.bf16.xpose.msra.mxu0 0
        %713 = vmatpush.bf16.xpose.msra.mxu0 0
        %714 = vmatpush.bf16.xpose.msra.mxu0 %v705
        %715 = vmatmul.bf16.gmra.mxu0 %v702
        %v716 = vpop.f32.mrf.mxu0
        %v717 = vadd.f32 0.0, %v716
        %v718 = vpop.f32.mrf.mxu0
        %719 = vdwg.mxu0
        %vm720 = vcmask 64512
        %v721 = vsel %vm720, %v698, -inf
        %722 = vmax.xlane.f32.xlu0 %v721
        %v723 = vpop.xlane.xlu0 %722
        %v724 = vsel %vm720, %v717, -inf
        %725 = vmax.xlane.f32.xlu0 %v724
        %v726 = vpop.xlane.xlu0 %725
        %v727 = vsub.f32 %v698, %v723
        %v728 = vsub.f32 %v717, %v726
        %v729 = vmul.f32 %v727, 1.442695
        %v730 = vpow.pop %v729
        %v731 = vmul.f32 %v728, 1.442695
        %v732 = vpow.pop %v731
        %v733 = vsel %vm720, %v730, 0.0
        %734 = vadd.xlane.f32.xlu0 %v733
        %v735 = vpop.xlane.xlu0 %734
        %v736 = vsel %vm720, %v732, 0.0
        %737 = vadd.xlane.f32.xlu0 %v736
        %v738 = vpop.xlane.xlu0 %737
        %v739 = vrcp.pop %v735
        %v740 = vrcp.pop %v738
        %v741 = vmul.f32 %v730, %v739
        %v742 = vmul.f32 %v732, %v740
        %v743 = vpack.c.bf16 %v741, %v741
        %v744 = vpack.c.bf16 %v742, %v742
        %v746 = vsel %vm720, %v743, 0
        %vm748 = vcmask 1043456
        %v750 = vsel %vm748, %v679, 0
        %752 = vmatpush.bf16.msra.mxu0 0
        %753 = vmatpush.bf16.msra.mxu0 0
        %754 = vmatpush.bf16.msra.mxu0 0
        %755 = vmatpush.bf16.msra.mxu0 0
        %756 = vmatpush.bf16.msra.mxu0 0
        %757 = vmatpush.bf16.msra.mxu0 0
        %758 = vmatpush.bf16.msra.mxu0 0
        %759 = vmatpush.bf16.msra.mxu0 %v750
        %760 = vmatmul.bf16.gmra.mxu0 %v746
        %v761 = vpop.f32.mrf.mxu0
        %v762 = vadd.f32 0.0, %v761
        %v763 = vpop.f32.mrf.mxu0
        %764 = vdwg.mxu0
        %v766 = vsel %vm720, %v744, 0
        %v769 = vsel %vm748, %v680, 0
        %771 = vmatpush.bf16.msra.mxu0 0
        %772 = vmatpush.bf16.msra.mxu0 0
        %773 = vmatpush.bf16.msra.mxu0 0
        %774 = vmatpush.bf16.msra.mxu0 0
        %775 = vmatpush.bf16.msra.mxu0 0
        %776 = vmatpush.bf16.msra.mxu0 0
        %777 = vmatpush.bf16.msra.mxu0 0
        %778 = vmatpush.bf16.msra.mxu0 %v769
        %779 = vmatmul.bf16.gmra.mxu0 %v766
        %v780 = vpop.f32.mrf.mxu0
        %v781 = vadd.f32 0.0, %v780
        %v782 = vpop.f32.mrf.mxu0
        %783 = vdwg.mxu0
        %v785 = vunpack.c.l.b16 %v675
        %v786 = vpack.c.b16 %v785, %v785
        %787 = vrot.lane.b32.xlu0 %v786, 112
        %v788 = vpop.permute.xlu0 %787
        %v790 = vunpack.c.l.b16 %v677
        %v791 = vpack.c.b16 %v790, %v790
        %792 = vrot.lane.b32.xlu0 %v791, 112
        %v793 = vpop.permute.xlu0 %792
        %v795 = vsel %vm681, %v788, 0
        %v798 = vsel %vm681, %v793, 0
        %800 = vmatpush.bf16.xpose.msra.mxu0 0
        %801 = vmatpush.bf16.xpose.msra.mxu0 0
        %802 = vmatpush.bf16.xpose.msra.mxu0 0
        %803 = vmatpush.bf16.xpose.msra.mxu0 0
        %804 = vmatpush.bf16.xpose.msra.mxu0 0
        %805 = vmatpush.bf16.xpose.msra.mxu0 0
        %806 = vmatpush.bf16.xpose.msra.mxu0 0
        %807 = vmatpush.bf16.xpose.msra.mxu0 %v798
        %808 = vmatmul.bf16.gmra.mxu0 %v795
        %v809 = vpop.f32.mrf.mxu0
        %v810 = vadd.f32 0.0, %v809
        %v811 = vpop.f32.mrf.mxu0
        %812 = vdwg.mxu0
        %v814 = vunpack.c.l.b16 %v676
        %v815 = vpack.c.b16 %v814, %v814
        %816 = vrot.lane.b32.xlu0 %v815, 112
        %v817 = vpop.permute.xlu0 %816
        %v819 = vunpack.c.l.b16 %v678
        %v820 = vpack.c.b16 %v819, %v819
        %821 = vrot.lane.b32.xlu0 %v820, 112
        %v822 = vpop.permute.xlu0 %821
        %v824 = vsel %vm681, %v817, 0
        %v827 = vsel %vm681, %v822, 0
        %829 = vmatpush.bf16.xpose.msra.mxu0 0
        %830 = vmatpush.bf16.xpose.msra.mxu0 0
        %831 = vmatpush.bf16.xpose.msra.mxu0 0
        %832 = vmatpush.bf16.xpose.msra.mxu0 0
        %833 = vmatpush.bf16.xpose.msra.mxu0 0
        %834 = vmatpush.bf16.xpose.msra.mxu0 0
        %835 = vmatpush.bf16.xpose.msra.mxu0 0
        %836 = vmatpush.bf16.xpose.msra.mxu0 %v827
        %837 = vmatmul.bf16.gmra.mxu0 %v824
        %v838 = vpop.f32.mrf.mxu0
        %v839 = vadd.f32 0.0, %v838
        %v840 = vpop.f32.mrf.mxu0
        %841 = vdwg.mxu0
        %v842 = vsel %vm720, %v810, -inf
        %843 = vmax.xlane.f32.xlu0 %v842
        %v844 = vpop.xlane.xlu0 %843
        %v845 = vsel %vm720, %v839, -inf
        %846 = vmax.xlane.f32.xlu0 %v845
        %v847 = vpop.xlane.xlu0 %846
        %v848 = vsub.f32 %v810, %v844
        %v849 = vsub.f32 %v839, %v847
        %v850 = vmul.f32 %v848, 1.442695
        %v851 = vpow.pop %v850
        %v852 = vmul.f32 %v849, 1.442695
        %v853 = vpow.pop %v852
        %v854 = vsel %vm720, %v851, 0.0
        %855 = vadd.xlane.f32.xlu0 %v854
        %v856 = vpop.xlane.xlu0 %855
        %v857 = vsel %vm720, %v853, 0.0
        %858 = vadd.xlane.f32.xlu0 %v857
        %v859 = vpop.xlane.xlu0 %858
        %v860 = vrcp.pop %v856
        %v861 = vrcp.pop %v859
        %v862 = vmul.f32 %v851, %v860
        %v863 = vmul.f32 %v853, %v861
        %v864 = vpack.c.bf16 %v862, %v862
        %v865 = vpack.c.bf16 %v863, %v863
        %v867 = vunpack.c.l.b16 %v679
        %v868 = vpack.c.b16 %v867, %v867
        %869 = vrot.lane.b32.xlu0 %v868, 112
        %v870 = vpop.permute.xlu0 %869
        %v872 = vsel %vm720, %v864, 0
        %v875 = vsel %vm748, %v870, 0
        %877 = vmatpush.bf16.msra.mxu0 0
        %878 = vmatpush.bf16.msra.mxu0 0
        %879 = vmatpush.bf16.msra.mxu0 0
        %880 = vmatpush.bf16.msra.mxu0 0
        %881 = vmatpush.bf16.msra.mxu0 0
        %882 = vmatpush.bf16.msra.mxu0 0
        %883 = vmatpush.bf16.msra.mxu0 0
        %884 = vmatpush.bf16.msra.mxu0 %v875
        %885 = vmatmul.bf16.gmra.mxu0 %v872
        %v886 = vpop.f32.mrf.mxu0
        %v887 = vadd.f32 0.0, %v886
        %v888 = vpop.f32.mrf.mxu0
        %889 = vdwg.mxu0
        %v891 = vunpack.c.l.b16 %v680
        %v892 = vpack.c.b16 %v891, %v891
        %893 = vrot.lane.b32.xlu0 %v892, 112
        %v894 = vpop.permute.xlu0 %893
        %v896 = vsel %vm720, %v865, 0
        %v899 = vsel %vm748, %v894, 0
        %901 = vmatpush.bf16.msra.mxu0 0
        %902 = vmatpush.bf16.msra.mxu0 0
        %903 = vmatpush.bf16.msra.mxu0 0
        %904 = vmatpush.bf16.msra.mxu0 0
        %905 = vmatpush.bf16.msra.mxu0 0
        %906 = vmatpush.bf16.msra.mxu0 0
        %907 = vmatpush.bf16.msra.mxu0 0
        %908 = vmatpush.bf16.msra.mxu0 %v899
        %909 = vmatmul.bf16.gmra.mxu0 %v896
        %v910 = vpop.f32.mrf.mxu0
        %v911 = vadd.f32 0.0, %v910
        %v912 = vpop.f32.mrf.mxu0
        %913 = vdwg.mxu0
        %916 = vrot.lane.b32.xlu0 %v887, 16
        %v917 = vpop.permute.xlu0 %916
        %918 = vrot.lane.b32.xlu0 %v911, 16
        %v919 = vpop.permute.xlu0 %918
        %v922 = vsel %vm681, %v762, %v917
        %v923 = vsel %vm681, %v781, %v919
        %v924 = vpack.c.bf16 %v923, %v922
        %v925 = vld [vmem:[%s408] sm:$0xf]
        %v926 = vld [vmem:[%s408 + $0x4] sm:$0xf]
        %v927 = vld [vmem:[%s408 + $0x8] sm:$0xf]
        %v928 = vld [vmem:[%s408 + $0xc] sm:$0xf]
        %v929 = vperm.slane %v520, 2
        %v934 = vunpack.c.l.b16 %v925
        %v935 = vunpack.c.l.b16 %v926
        %v936 = vunpack.c.l.b16 %v927
        %v937 = vunpack.c.l.b16 %v928
        %v938 = vpack.c.b16 %v935, %v934
        %v939 = vpack.c.b16 %v937, %v936
        %v943 = vsel %vm521, %v924, 0
        %945 = vmatpush.bf16.msra.mxu0 0
        %946 = vmatpush.bf16.msra.mxu0 0
        %947 = vmatpush.bf16.msra.mxu0 0
        %948 = vmatpush.bf16.msra.mxu0 0
        %949 = vmatpush.bf16.msra.mxu0 0
        %950 = vmatpush.bf16.msra.mxu0 0
        %951 = vmatpush.bf16.msra.mxu0 %v939
        %952 = vmatpush.bf16.msra.mxu0 %v938
        %953 = vmatmul.bf16.gmra.mxu0 %v943
        %v954 = vpop.f32.mrf.mxu0
        %v955 = vadd.f32 %v929, %v954
        %v956 = vpop.f32.mrf.mxu0
        %v957 = vadd.f32 %v929, %v956
        %958 = vdwg.mxu0
        %v959 = vadd.f32 %v518, %v955
        %v960 = vadd.f32 %v519, %v957
        %v961 = vsel %vm521, %v959, 0.0
        %962 = vadd.xlane.f32.xlu0 %v961
        %v963 = vpop.xlane.xlu0 %962
        %v964 = vsel %vm521, %v960, 0.0
        %965 = vadd.xlane.f32.xlu0 %v964
        %v966 = vpop.xlane.xlu0 %965
        %v967 = vmul.f32 %v963, %v534
        %v968 = vmul.f32 %v966, %v534
        %v969 = vsub.f32 %v959, %v967
        %v970 = vsub.f32 %v960, %v968
        %v971 = vmul.f32 %v969, %v969
        %v972 = vmul.f32 %v970, %v970
        %v973 = vsel %vm521, %v971, 0.0
        %974 = vadd.xlane.f32.xlu0 %v973
        %v975 = vpop.xlane.xlu0 %974
        %v976 = vsel %vm521, %v972, 0.0
        %977 = vadd.xlane.f32.xlu0 %v976
        %v978 = vpop.xlane.xlu0 %977
        %v979 = vmul.f32 %v975, %v534
        %v980 = vmul.f32 %v978, %v534
        %v981 = vadd.f32 %v979, 1e-05
        %v982 = vadd.f32 %v980, 1e-05
        %v983 = vrsqrt.pop %v981
        %v984 = vmul.f32 %v983, %v981
        %v985 = vmul.f32 %v984, %v983
        %v986 = vmul.f32 0.5, %v985
        %v987 = vsub.f32 1.5, %v986
        %v988 = vmul.f32 %v983, %v987
        %vm989 = vweird.f32 %v981
        %vm990 = vweird.f32 %v983
        %vm991 = vmor %vm989, %vm990
        %v992 = vsel %vm991, %v983, %v988
        %v993 = vrsqrt.pop %v982
        %v994 = vmul.f32 %v993, %v982
        %v995 = vmul.f32 %v994, %v993
        %v996 = vmul.f32 0.5, %v995
        %v997 = vsub.f32 1.5, %v996
        %v998 = vmul.f32 %v993, %v997
        %vm999 = vweird.f32 %v982
        %vm1000 = vweird.f32 %v993
        %vm1001 = vmor %vm999, %vm1000
        %v1002 = vsel %vm1001, %v993, %v998
        %v1003 = vmul.f32 %v969, %v992
        %v1004 = vmul.f32 %v970, %v1002
        %v1005 = vperm.slane %v520, 3
        %v1006 = vmul.f32 %v1003, %v1005
        %v1007 = vmul.f32 %v1004, %v1005
        %v1008 = vperm.slane %v520, 4
        %v1009 = vadd.f32 %v1006, %v1008
        %v1010 = vadd.f32 %v1007, %v1008
        %v1011 = vpack.c.bf16 %v1010, %v1009
        %v1012 = vld [vmem:[%s418] sm:$0xf]
        %v1013 = vld [vmem:[%s418 + $0x4] sm:$0xf]
        %v1014 = vld [vmem:[%s418 + $0x8] sm:$0xf]
        %v1015 = vld [vmem:[%s418 + $0xc] sm:$0xf]
        %v1016 = vld [vmem:[%s502] sm:$0x1]
        %v1018 = vperm.slane %v1016, 0
        %v1024 = vunpack.c.l.b16 %v1012
        %v1025 = vunpack.c.l.b16 %v1013
        %v1026 = vunpack.c.l.b16 %v1014
        %v1027 = vunpack.c.l.b16 %v1015
        %v1028 = vpack.c.b16 %v1025, %v1024
        %v1029 = vpack.c.b16 %v1027, %v1026
        %v1033 = vsel %vm521, %v1011, 0
        %1035 = vmatpush.bf16.msra.mxu0 0
        %1036 = vmatpush.bf16.msra.mxu0 0
        %1037 = vmatpush.bf16.msra.mxu0 0
        %1038 = vmatpush.bf16.msra.mxu0 0
        %1039 = vmatpush.bf16.msra.mxu0 0
        %1040 = vmatpush.bf16.msra.mxu0 0
        %1041 = vmatpush.bf16.msra.mxu0 %v1029
        %1042 = vmatpush.bf16.msra.mxu0 %v1028
        %1043 = vmatmul.bf16.gmra.mxu0 %v1033
        %v1044 = vpop.f32.mrf.mxu0
        %v1045 = vadd.f32 %v1018, %v1044
        %v1046 = vpop.f32.mrf.mxu0
        %v1047 = vadd.f32 %v1018, %v1046
        %1048 = vdwg.mxu0
        %v1049 = vmul.f32 %v1045, 0.5
        %v1050 = vmul.f32 %v1047, 0.5
        %v1051 = vmul.f32 %v1045, 0.70710677
        %v1052 = vmul.f32 %v1047, 0.70710677
        %v1053 = vmul.f32 %v1051, %v1051
        %v1054 = vmin.f32 16.0, %v1053
        %v1055 = vmul.f32 %v1054, 2.1237322e-06
        %v1056 = vadd.f32 %v1055, 0.00028619796
        %v1057 = vmul.f32 %v1054, %v1056
        %v1058 = vadd.f32 %v1057, 0.0036580483
        %v1059 = vmul.f32 %v1054, %v1058
        %v1060 = vadd.f32 %v1059, 0.05243302
        %v1061 = vmul.f32 %v1054, %v1060
        %v1062 = vadd.f32 %v1061, 0.18741608
        %v1063 = vmul.f32 %v1054, %v1062
        %v1064 = vadd.f32 %v1063, 1.1283791
        %v1065 = vmul.f32 %v1051, %v1064
        %v1066 = vmul.f32 %v1054, 3.8918573e-05
        %v1067 = vadd.f32 %v1066, 0.001143296
        %v1068 = vmul.f32 %v1054, %v1067
        %v1069 = vadd.f32 %v1068, 0.014752088
        %v1070 = vmul.f32 %v1054, %v1069
        %v1071 = vadd.f32 %v1070, 0.112945676
        %v1072 = vmul.f32 %v1054, %v1071
        %v1073 = vadd.f32 %v1072, 0.4994258
        %v1074 = vmul.f32 %v1054, %v1073
        %v1075 = vadd.f32 %v1074, 1.0
        %v1076 = vrcp.pop %v1075
        %v1077 = vmul.f32 %v1075, %v1076
        %v1078 = vsub.f32 1.0, %v1077
        %v1079 = vmul.f32 %v1076, %v1078
        %v1080 = vadd.f32 %v1076, %v1079
        %vm1081 = vweird.f32 %v1075
        %vm1082 = vweird.f32 %v1076
        %vm1083 = vmor %vm1081, %vm1082
        %v1084 = vsel %vm1083, %v1076, %v1080
        %v1085 = vand.u32 2147483647, %v1075
        %vm1086 = vcmp.eq.f32.partialorder %v1085, 8.507059e+37
        %v1087 = vand.u32 %v1075, 2147483648
        %v1088 = vor.u32 1.1754944e-38, %v1087
        %v1089 = vsel %vm1086, %v1088, %v1084
        %v1090 = vmul.f32 %v1065, %v1089
        %v1091 = vmin.f32 %v1090, 1.0
        %v1092 = vmax.f32 %v1091, -1.0
        %v1093 = vmul.f32 %v1052, %v1052
        %v1094 = vmin.f32 16.0, %v1093
        %v1095 = vmul.f32 %v1094, 2.1237322e-06
        %v1096 = vadd.f32 %v1095, 0.00028619796
        %v1097 = vmul.f32 %v1094, %v1096
        %v1098 = vadd.f32 %v1097, 0.0036580483
        %v1099 = vmul.f32 %v1094, %v1098
        %v1100 = vadd.f32 %v1099, 0.05243302
        %v1101 = vmul.f32 %v1094, %v1100
        %v1102 = vadd.f32 %v1101, 0.18741608
        %v1103 = vmul.f32 %v1094, %v1102
        %v1104 = vadd.f32 %v1103, 1.1283791
        %v1105 = vmul.f32 %v1052, %v1104
        %v1106 = vmul.f32 %v1094, 3.8918573e-05
        %v1107 = vadd.f32 %v1106, 0.001143296
        %v1108 = vmul.f32 %v1094, %v1107
        %v1109 = vadd.f32 %v1108, 0.014752088
        %v1110 = vmul.f32 %v1094, %v1109
        %v1111 = vadd.f32 %v1110, 0.112945676
        %v1112 = vmul.f32 %v1094, %v1111
        %v1113 = vadd.f32 %v1112, 0.4994258
        %v1114 = vmul.f32 %v1094, %v1113
        %v1115 = vadd.f32 %v1114, 1.0
        %v1116 = vrcp.pop %v1115
        %v1117 = vmul.f32 %v1115, %v1116
        %v1118 = vsub.f32 1.0, %v1117
        %v1119 = vmul.f32 %v1116, %v1118
        %v1120 = vadd.f32 %v1116, %v1119
        %vm1121 = vweird.f32 %v1115
        %vm1122 = vweird.f32 %v1116
        %vm1123 = vmor %vm1121, %vm1122
        %v1124 = vsel %vm1123, %v1116, %v1120
        %v1125 = vand.u32 2147483647, %v1115
        %vm1126 = vcmp.eq.f32.partialorder %v1125, 8.507059e+37
        %v1127 = vand.u32 %v1115, 2147483648
        %v1128 = vor.u32 1.1754944e-38, %v1127
        %v1129 = vsel %vm1126, %v1128, %v1124
        %v1130 = vmul.f32 %v1105, %v1129
        %v1131 = vmin.f32 %v1130, 1.0
        %v1132 = vmax.f32 %v1131, -1.0
        %v1133 = vadd.f32 %v1092, 1.0
        %v1134 = vadd.f32 %v1132, 1.0
        %v1135 = vmul.f32 %v1049, %v1133
        %v1136 = vmul.f32 %v1050, %v1134
        %v1137 = vpack.c.bf16 %v1136, %v1135
        %v1138 = vld [vmem:[%s507] sm:$0xf]
        %v1139 = vld [vmem:[%s507 + $0x4] sm:$0xf]
        %v1140 = vld [vmem:[%s507 + $0x8] sm:$0xf]
        %v1141 = vld [vmem:[%s507 + $0xc] sm:$0xf]
        %v1142 = vld [vmem:[%s507 + $0x10] sm:$0xf]
        %v1143 = vld [vmem:[%s507 + $0x14] sm:$0xf]
        %v1144 = vld [vmem:[%s507 + $0x18] sm:$0xf]
        %v1145 = vld [vmem:[%s507 + $0x1c] sm:$0xf]
        %v1146 = vperm.slane %v520, 5
        %v1155 = vunpack.c.l.b16 %v1138
        %v1156 = vunpack.c.l.b16 %v1139
        %v1157 = vunpack.c.l.b16 %v1140
        %v1158 = vunpack.c.l.b16 %v1141
        %v1159 = vunpack.c.l.b16 %v1142
        %v1160 = vunpack.c.l.b16 %v1143
        %v1161 = vunpack.c.l.b16 %v1144
        %v1162 = vunpack.c.l.b16 %v1145
        %v1163 = vpack.c.b16 %v1156, %v1155
        %v1164 = vpack.c.b16 %v1158, %v1157
        %v1165 = vpack.c.b16 %v1160, %v1159
        %v1166 = vpack.c.b16 %v1162, %v1161
        %vm1171 = vcmask 523264
        %v1173 = vsel %vm1171, %v1137, 0
        %1175 = vmatpush.bf16.msra.mxu0 0
        %1176 = vmatpush.bf16.msra.mxu0 0
        %1177 = vmatpush.bf16.msra.mxu0 0
        %1178 = vmatpush.bf16.msra.mxu0 0
        %1179 = vmatpush.bf16.msra.mxu0 %v1166
        %1180 = vmatpush.bf16.msra.mxu0 %v1165
        %1181 = vmatpush.bf16.msra.mxu0 %v1164
        %1182 = vmatpush.bf16.msra.mxu0 %v1163
        %1183 = vmatmul.bf16.gmra.mxu0 %v1173
        %v1184 = vpop.f32.mrf.mxu0
        %v1185 = vadd.f32 %v1146, %v1184
        %v1186 = vpop.f32.mrf.mxu0
        %v1187 = vadd.f32 %v1146, %v1186
        %1188 = vdwg.mxu0
        %v1189 = vadd.f32 %v959, %v1185
        %v1190 = vadd.f32 %v960, %v1187
        %1191 = vst.msk [vmem:[#allocation2] sm:$0xff] %vm521, %v1189
        %1192 = vst.msk [vmem:[#allocation2 + $0x8] sm:$0xff] %vm521, %v1190
        %p1193 = scmp.eq.s32.totalorder %s25, 1
        // Predicated region
        $region73: #{tpu_custom_call.1} parent=55 // pred_check
          %p1194 = pneg %p1193
        $region74: #{tpu_custom_call.1} parent=55 // pred_check_branch
          %1196 = sbr.rel (%p1194) target = $region76
        $region75: #{tpu_custom_call.1} parent=55 // pred_region
          %1197 = vst.msk [vmem:[#allocation9] sm:$0xff] %vm521, %v1189
          %1198 = vst.msk [vmem:[#allocation9 + $0x8] sm:$0xff] %vm521, %v1190
        $region76: #{tpu_custom_call.1} parent=55 // pred_fallthru
          _
        // Predicated region
        $region77: #{tpu_custom_call.1} parent=55 // pred_check
          %p1199 = pneg %p267
        $region78: #{tpu_custom_call.1} parent=55 // pred_check_branch
          %1201 = sbr.rel (%p1199) target = $region80
        $region79: #{tpu_custom_call.1} parent=55 // pred_region
          %1203 = vsyncadd [#allocation5], 0
          %s1204 = sshll.u32 [#allocation9], 4
          %s1205 = int_to_ptr.vmem [resolvable:$true] %s1204
          %s1206 = sshll.u32 %s9, 4
          %s1207 = int_to_ptr.hbm [resolvable:$true] %s1206
          %1212 = dma.vmem_to_hbm [thread:$0]  %s1205, 256, %s1207, [#allocation5], 128, 128, 8
        $region80: #{tpu_custom_call.1} parent=55 // pred_fallthru
          _
        // Predicated region
        $region81: #{tpu_custom_call.1} parent=55 // pred_check
          %p1213 = pneg %p267
        $region82: #{tpu_custom_call.1} parent=55 // pred_check_branch
          %1215 = sbr.rel (%p1213) target = $region84
        $region83: #{tpu_custom_call.1} parent=55 // pred_region
          %1217 = dma.done [#allocation5], 256
        $region84: #{tpu_custom_call.1} parent=55 // pred_fallthru
          _
      $region56: #{tpu_custom_call.1} parent=5 // pred_fallthru
        _
      %p1218 = scmp.le.s32.totalorder 2, %s20
      // Predicated region
      $region85: #{tpu_custom_call.1} parent=5 // pred_check
        %p1219 = pneg %p1218
      $region86: #{tpu_custom_call.1} parent=5 // pred_check_branch
        %1221 = sbr.rel (%p1219) target = $region88
      $region87: #{tpu_custom_call.1} parent=5 // pred_region
        %s1222 = ssub.s32 %s20, 2
      $region88: #{tpu_custom_call.1} parent=5 // pred_fallthru
        _
    $region6: #{tpu_custom_call.1} parent=1 // loop_footer
      %s24 = sadd.s32 1, %s20
    $region7: #{tpu_custom_call.1} parent=1 // loop_footer_branch
      %19 = sbr.rel target = $region3
    $region8: #{tpu_custom_call.1} parent=1 // loop_exit
      _
    %1223 = vsyncpa [#allocation4], 1
    %s1224 = scalar_lea.sflag [#allocation4], 1
    %1225 = vsyncpa %s1224, 1
    %1226 = vsyncpa [#allocation7], 1
    %s1227 = scalar_lea.sflag [#allocation7], 1
    %1228 = vsyncpa %s1227, 1
    %1229 = vsyncpa [#allocation5], 1
    %s1230 = scalar_lea.sflag [#allocation5], 1
    %1231 = vsyncpa %s1230, 1

</llo_original>
